<compile_context>
chip_gen: v7x
topology: tpu7x:2x2x1
jax: 0.10.0
libtpu: 0.0.40
codegen_flags: <defaults>
</compile_context>

<pallas_src>
import jax
import jax.numpy as jnp
from jax import lax
from jax.experimental import pallas as pl
from jax.experimental.pallas import tpu as pltpu


def _alpha_param_kernel(x_ref,
                        w0_ref, b0_ref,
                        w1_ref, b1_ref,
                        w2_ref, b2_ref,
                        w3_ref, b3_ref,
                        w4_ref, b4_ref,
                        out_ref):
    # x arrives batch-major (TM, n_state) in bf16.  Contracting the shared last
    # dims of (w0, x) puts the layer-0 result directly in channels-on-sublane /
    # batch-on-lane layout, so all intermediates and the (1, TM) output store
    # are lane-dense -- and no wrapper-side transpose/pad of the input exists.
    x = x_ref[...]                                              # (TM, n_state)

    # conv0 + ReLU : contract n_state -> (64, TM)
    h = lax.dot_general(w0_ref[...], x, (((1,), (1,)), ((), ())),
                        preferred_element_type=jnp.float32) + b0_ref[...]
    h = jnp.maximum(h, 0.0)                                     # (64, TM) f32

    # conv1..conv3 + ReLU (bf16 MXU operands, f32 accumulation; bias-add/ReLU
    # kept in f32 so the VPU path is valid on v5e as well).
    for w_ref, b_ref in ((w1_ref, b1_ref), (w2_ref, b2_ref), (w3_ref, b3_ref)):
        h = jnp.dot(w_ref[...], h.astype(jnp.bfloat16),
                    preferred_element_type=jnp.float32) + b_ref[...]
        h = jnp.maximum(h, 0.0)                                 # (128, TM) f32

    # conv4 (C_out = 1, no activation): VPU multiply + sublane reduction in f32
    # instead of a 1-row MXU matmul (keeps the MXU result FIFO free).
    alpha = jnp.sum(h * w4_ref[...], axis=0, keepdims=True) + b4_ref[...]
    out_ref[...] = alpha.astype(out_ref.dtype)                  # (1, TM)


def _cdiv(a, b):
    return -(-a // b)


def _round_up(a, m):
    return _cdiv(a, m) * m


def _choose_tiling(bs, *, tm_max=4096, lane=128, prefer_even_steps=True):
    """Adaptive batch tiling: fewest balanced steps at 128-lane-aligned tiles."""
    n_steps = _cdiv(bs, tm_max)
    # v7x megacore: the "parallel" grid axis only shards across the 2 TCs with
    # >= 2 (even, balanced) steps.  On 1-TC chips (v5e/v6e) the extra step
    # costs ~0.35us + <tm padded columns -- negligible at these sizes.
    if prefer_even_steps and bs > lane and n_steps % 2 == 1:
        n_steps += 1
    tm = _round_up(_cdiv(bs, n_steps), lane)
    return tm, n_steps


def alpha_param_forward(state, params, *, tm_max=4096, prefer_even_steps=True):
    """state: (bs, n_state) f32 -> alpha: (bs, 1) f32."""
    bs, n_state = state.shape
    (w0, b0), (w1, b1), (w2, b2), (w3, b3), (w4, b4) = params

    tm, n_steps = _choose_tiling(bs, tm_max=tm_max,
                                 prefer_even_steps=prefer_even_steps)
    padded_bs = tm * n_steps
    grid = (n_steps,)

    # Stream the input batch-major exactly as given (no transpose / pad op);
    # a single cheap bf16 cast halves the per-step input DMA.  Padded rows of
    # the last block read unspecified values, but every output column depends
    # only on its own input row, so garbage stays in sliced-off columns.
    x_bf = state.astype(jnp.bfloat16)

    # MXU operands in bf16 (f32 accumulation inside the kernel); biases and the
    # final VPU layer stay f32.
    w0b, w1b, w2b, w3b = (w.astype(jnp.bfloat16) for w in (w0, w1, w2, w3))
    b0c, b1c, b2c, b3c = (b.astype(jnp.float32)[:, None] for b in (b0, b1, b2, b3))
    w4c = w4.astype(jnp.float32).T            # (128, 1) column for mul+reduce
    b4c = b4.astype(jnp.float32)[:, None]     # (1, 1)

    def _x_map(i):
        return (i, 0)

    def _out_map(i):
        return (0, i)

    def _resident_map(i):          # weights/biases: same block every step ->
        return (0, 0)              # DMA'd once, VMEM-resident across the grid

    def _full(a):                  # evaluated immediately per array: no
        return pl.BlockSpec(a.shape, _resident_map)  # late-binding closure bug

    in_specs = [pl.BlockSpec((tm, n_state), _x_map),
                _full(w0b), _full(b0c),
                _full(w1b), _full(b1c),
                _full(w2b), _full(b2c),
                _full(w3b), _full(b3c),
                _full(w4c), _full(b4c)]

    macs = n_state * 64 + 64 * 128 + 128 * 128 + 128 * 128 + 128
    weight_args = (w0b, b0c, w1b, b1c, w2b, b2c, w3b, b3c, w4c, b4c)
    weight_bytes = sum(int(a.size) * a.dtype.itemsize for a in weight_args)
    cost = pl.CostEstimate(
        flops=2 * macs * padded_bs,
        transcendentals=0,
        bytes_accessed=bs * n_state * 2 + weight_bytes + padded_bs * 4)

    out = pl.pallas_call(
        _alpha_param_kernel,
        out_shape=jax.ShapeDtypeStruct((1, padded_bs), jnp.float32),
        grid=grid,
        in_specs=in_specs,
        out_specs=pl.BlockSpec((1, tm), _out_map),
        compiler_params=pltpu.CompilerParams(
            dimension_semantics=("parallel",),      # megacore sharding on v7x
            vmem_limit_bytes=32 * 1024 * 1024),     # headroom for TM up to 4096
        cost_estimate=cost,
    )(x_bf, *weight_args)

    # match torch.squeeze(x, dim=1): alpha has shape (bs, 1)
    return out[0, :bs][:, None]


def init_params(key, n_state):
    """PyTorch Conv1d default init (U[-1/sqrt(fan_in), +]); native layout:
    weight (C_out, C_in) (kernel dim squeezed), bias (C_out,)."""
    dims = [(n_state, 64), (64, 128), (128, 128), (128, 128), (128, 1)]
    params = []
    for (c_in, c_out) in dims:
        key, kw, kb = jax.random.split(key, 3)
        bound = float(c_in) ** -0.5
        w = jax.random.uniform(kw, (c_out, c_in), jnp.float32, -bound, bound)
        b = jax.random.uniform(kb, (c_out,), jnp.float32, -bound, bound)
        params.append((w, b))
    return params


def _reference(state, params):
    """Pure-JAX reference mirroring the kernel numerics (bf16 MXU operands,
    f32 accumulation, f32 elementwise, f32 mul+reduce final layer)."""
    x = state.astype(jnp.float32)
    for w, b in params[:-1]:
        x = jnp.dot(x.astype(jnp.bfloat16), w.astype(jnp.bfloat16).T,
                    preferred_element_type=jnp.float32) + b[None, :]
        x = jnp.maximum(x, 0.0)
    w4, b4 = params[-1]
    return jnp.sum(x * w4[0][None, :].astype(jnp.float32),
                   axis=-1, keepdims=True) + b4[None, :]


if __name__ == "__main__":
    key = jax.random.PRNGKey(0)
    k_state, k_params, k_big = jax.random.split(key, 3)

    # Small demo shapes matching the module: state (bs=2, n_state=4).
    bs, n_state = 2, 4
    state = jax.random.normal(k_state, (bs, n_state), jnp.float32)
    params = init_params(k_params, n_state)

    alpha = alpha_param_forward(state, params)
    jax.block_until_ready(alpha)
    ref = _reference(state, params)
    assert alpha.shape == (bs, 1), alpha.shape
    assert jnp.allclose(alpha, ref, atol=1e-3, rtol=1e-3), (alpha, ref)

    # Also exercise the multi-step tiled path (even step count for v7x
    # megacore, lane-aligned partial tiles, OOB-padded last block).
    bs2 = 640
    state2 = jax.random.normal(k_big, (bs2, n_state), jnp.float32)
    alpha2 = alpha_param_forward(state2, params)
    jax.block_until_ready(alpha2)
    ref2 = _reference(state2, params)
    assert alpha2.shape == (bs2, 1), alpha2.shape
    assert jnp.allclose(alpha2, ref2, atol=1e-3, rtol=1e-3)

    print("KERNEL_OK")
</pallas_src>

<mosaic_0001>
module attributes {stable_mosaic.version = 11 : i64} {
  func.func @_alpha_param_kernel(%arg0: i32, %arg1: memref<128x4xbf16, #tpu.memory_space<vmem>>, %arg2: memref<64x4xbf16, #tpu.memory_space<vmem>>, %arg3: memref<64x1xf32, #tpu.memory_space<vmem>>, %arg4: memref<128x64xbf16, #tpu.memory_space<vmem>>, %arg5: memref<128x1xf32, #tpu.memory_space<vmem>>, %arg6: memref<128x128xbf16, #tpu.memory_space<vmem>>, %arg7: memref<128x1xf32, #tpu.memory_space<vmem>>, %arg8: memref<128x128xbf16, #tpu.memory_space<vmem>>, %arg9: memref<128x1xf32, #tpu.memory_space<vmem>>, %arg10: memref<128x1xf32, #tpu.memory_space<vmem>>, %arg11: memref<1x1xf32, #tpu.memory_space<vmem>>, %arg12: memref<1x128xf32, #tpu.memory_space<vmem>>) attributes {dimension_semantics = [#tpu.dimension_semantics<parallel>], iteration_bounds = array<i64: 1>, scalar_prefetch = 0 : i64, scratch_operands = 0 : i64, tpu.core_type = #tpu.core_type<tc>, window_params = [{transform_indices = @transform_0, window_bounds = array<i64: 128, 4>}, {pipeline_mode = #tpu.pipeline_mode<synchronous>, transform_indices = @transform_1, window_bounds = array<i64: 64, 4>}, {pipeline_mode = #tpu.pipeline_mode<synchronous>, transform_indices = @transform_2, window_bounds = array<i64: 64, 1>}, {pipeline_mode = #tpu.pipeline_mode<synchronous>, transform_indices = @transform_3, window_bounds = array<i64: 128, 64>}, {pipeline_mode = #tpu.pipeline_mode<synchronous>, transform_indices = @transform_4, window_bounds = array<i64: 128, 1>}, {pipeline_mode = #tpu.pipeline_mode<synchronous>, transform_indices = @transform_5, window_bounds = array<i64: 128, 128>}, {pipeline_mode = #tpu.pipeline_mode<synchronous>, transform_indices = @transform_6, window_bounds = array<i64: 128, 1>}, {pipeline_mode = #tpu.pipeline_mode<synchronous>, transform_indices = @transform_7, window_bounds = array<i64: 128, 128>}, {pipeline_mode = #tpu.pipeline_mode<synchronous>, transform_indices = @transform_8, window_bounds = array<i64: 128, 1>}, {pipeline_mode = #tpu.pipeline_mode<synchronous>, transform_indices = @transform_9, window_bounds = array<i64: 128, 1>}, {pipeline_mode = #tpu.pipeline_mode<synchronous>, transform_indices = @transform_10, window_bounds = array<i64: 1, 1>}, {transform_indices = @transform_11, window_bounds = array<i64: 1, 128>}]} {
    %c0 = arith.constant 0 : index
    %c0_0 = arith.constant 0 : index
    %0 = vector.load %arg1[%c0, %c0_0] : memref<128x4xbf16, #tpu.memory_space<vmem>>, vector<128x4xbf16>
    %c0_1 = arith.constant 0 : index
    %c0_2 = arith.constant 0 : index
    %1 = vector.load %arg2[%c0_1, %c0_2] : memref<64x4xbf16, #tpu.memory_space<vmem>>, vector<64x4xbf16>
    %cst = arith.constant dense<0.000000e+00> : vector<64x128xf32>
    %2 = tpu.matmul %1, %0, %cst {dimension_numbers = #tpu.dot_dimension_numbers<[1], [1], [0], [0], [0, 0, 1, 0], [], []>} : vector<64x4xbf16>, vector<128x4xbf16>, vector<64x128xf32> -> vector<64x128xf32>
    %c0_3 = arith.constant 0 : index
    %c0_4 = arith.constant 0 : index
    %3 = vector.load %arg3[%c0_3, %c0_4] : memref<64x1xf32, #tpu.memory_space<vmem>>, vector<64x1xf32>
    %4 = vector.broadcast %3 : vector<64x1xf32> to vector<64x128xf32>
    %5 = arith.addf %2, %4 : vector<64x128xf32>
    %cst_5 = arith.constant 0.000000e+00 : f32
    %6 = vector.broadcast %cst_5 : f32 to vector<64x128xf32>
    %7 = arith.maximumf %5, %6 : vector<64x128xf32>
    %c0_6 = arith.constant 0 : index
    %c0_7 = arith.constant 0 : index
    %8 = vector.load %arg4[%c0_6, %c0_7] : memref<128x64xbf16, #tpu.memory_space<vmem>>, vector<128x64xbf16>
    %9 = arith.truncf %7 : vector<64x128xf32> to vector<64x128xbf16>
    %cst_8 = arith.constant dense<0.000000e+00> : vector<128x128xf32>
    %10 = tpu.matmul %8, %9, %cst_8 {dimension_numbers = #tpu.dot_dimension_numbers<[1], [0], [0], [1], [0, 0, 1, 1], [], []>} : vector<128x64xbf16>, vector<64x128xbf16>, vector<128x128xf32> -> vector<128x128xf32>
    %c0_9 = arith.constant 0 : index
    %c0_10 = arith.constant 0 : index
    %11 = vector.load %arg5[%c0_9, %c0_10] : memref<128x1xf32, #tpu.memory_space<vmem>>, vector<128x1xf32>
    %12 = vector.broadcast %11 : vector<128x1xf32> to vector<128x128xf32>
    %13 = arith.addf %10, %12 : vector<128x128xf32>
    %cst_11 = arith.constant 0.000000e+00 : f32
    %14 = vector.broadcast %cst_11 : f32 to vector<128x128xf32>
    %15 = arith.maximumf %13, %14 : vector<128x128xf32>
    %c0_12 = arith.constant 0 : index
    %c0_13 = arith.constant 0 : index
    %16 = vector.load %arg6[%c0_12, %c0_13] : memref<128x128xbf16, #tpu.memory_space<vmem>>, vector<128x128xbf16>
    %17 = arith.truncf %15 : vector<128x128xf32> to vector<128x128xbf16>
    %cst_14 = arith.constant dense<0.000000e+00> : vector<128x128xf32>
    %18 = tpu.matmul %16, %17, %cst_14 {dimension_numbers = #tpu.dot_dimension_numbers<[1], [0], [0], [1], [0, 0, 1, 1], [], []>} : vector<128x128xbf16>, vector<128x128xbf16>, vector<128x128xf32> -> vector<128x128xf32>
    %c0_15 = arith.constant 0 : index
    %c0_16 = arith.constant 0 : index
    %19 = vector.load %arg7[%c0_15, %c0_16] : memref<128x1xf32, #tpu.memory_space<vmem>>, vector<128x1xf32>
    %20 = vector.broadcast %19 : vector<128x1xf32> to vector<128x128xf32>
    %21 = arith.addf %18, %20 : vector<128x128xf32>
    %cst_17 = arith.constant 0.000000e+00 : f32
    %22 = vector.broadcast %cst_17 : f32 to vector<128x128xf32>
    %23 = arith.maximumf %21, %22 : vector<128x128xf32>
    %c0_18 = arith.constant 0 : index
    %c0_19 = arith.constant 0 : index
    %24 = vector.load %arg8[%c0_18, %c0_19] : memref<128x128xbf16, #tpu.memory_space<vmem>>, vector<128x128xbf16>
    %25 = arith.truncf %23 : vector<128x128xf32> to vector<128x128xbf16>
    %cst_20 = arith.constant dense<0.000000e+00> : vector<128x128xf32>
    %26 = tpu.matmul %24, %25, %cst_20 {dimension_numbers = #tpu.dot_dimension_numbers<[1], [0], [0], [1], [0, 0, 1, 1], [], []>} : vector<128x128xbf16>, vector<128x128xbf16>, vector<128x128xf32> -> vector<128x128xf32>
    %c0_21 = arith.constant 0 : index
    %c0_22 = arith.constant 0 : index
    %27 = vector.load %arg9[%c0_21, %c0_22] : memref<128x1xf32, #tpu.memory_space<vmem>>, vector<128x1xf32>
    %28 = vector.broadcast %27 : vector<128x1xf32> to vector<128x128xf32>
    %29 = arith.addf %26, %28 : vector<128x128xf32>
    %cst_23 = arith.constant 0.000000e+00 : f32
    %30 = vector.broadcast %cst_23 : f32 to vector<128x128xf32>
    %31 = arith.maximumf %29, %30 : vector<128x128xf32>
    %c0_24 = arith.constant 0 : index
    %c0_25 = arith.constant 0 : index
    %32 = vector.load %arg10[%c0_24, %c0_25] : memref<128x1xf32, #tpu.memory_space<vmem>>, vector<128x1xf32>
    %33 = vector.broadcast %32 : vector<128x1xf32> to vector<128x128xf32>
    %34 = arith.mulf %31, %33 : vector<128x128xf32>
    %cst_26 = arith.constant dense<0.000000e+00> : vector<128xf32>
    %35 = vector.multi_reduction <add>, %34, %cst_26 [0] : vector<128x128xf32> to vector<128xf32>
    %36 = vector.shape_cast %35 : vector<128xf32> to vector<1x128xf32>
    %c0_27 = arith.constant 0 : index
    %c0_28 = arith.constant 0 : index
    %37 = vector.load %arg11[%c0_27, %c0_28] : memref<1x1xf32, #tpu.memory_space<vmem>>, vector<1x1xf32>
    %38 = vector.broadcast %37 : vector<1x1xf32> to vector<1x128xf32>
    %39 = arith.addf %36, %38 : vector<1x128xf32>
    %c0_29 = arith.constant 0 : index
    %c0_30 = arith.constant 0 : index
    %40 = vector.load %arg12[%c0_29, %c0_30] : memref<1x128xf32, #tpu.memory_space<vmem>>, vector<1x128xf32>
    tpu.vector_store %arg12[%c0_29, %c0_30], %39 {strides = array<i32>} : memref<1x128xf32, #tpu.memory_space<vmem>>, vector<1x128xf32>,
    return
  }
  func.func @transform_0(%arg0: i32) -> (i32, i32) {
    %c0_i32 = arith.constant 0 : i32
    %c0_i32_0 = arith.constant 0 : i32
    return %arg0, %c0_i32 : i32, i32
  }
  func.func @transform_1(%arg0: i32) -> (i32, i32) {
    %c0_i32 = arith.constant 0 : i32
    %c0_i32_0 = arith.constant 0 : i32
    %c0_i32_1 = arith.constant 0 : i32
    return %c0_i32, %c0_i32_0 : i32, i32
  }
  func.func @transform_2(%arg0: i32) -> (i32, i32) {
    %c0_i32 = arith.constant 0 : i32
    %c0_i32_0 = arith.constant 0 : i32
    %c0_i32_1 = arith.constant 0 : i32
    return %c0_i32, %c0_i32_0 : i32, i32
  }
  func.func @transform_3(%arg0: i32) -> (i32, i32) {
    %c0_i32 = arith.constant 0 : i32
    %c0_i32_0 = arith.constant 0 : i32
    %c0_i32_1 = arith.constant 0 : i32
    return %c0_i32, %c0_i32_0 : i32, i32
  }
  func.func @transform_4(%arg0: i32) -> (i32, i32) {
    %c0_i32 = arith.constant 0 : i32
    %c0_i32_0 = arith.constant 0 : i32
    %c0_i32_1 = arith.constant 0 : i32
    return %c0_i32, %c0_i32_0 : i32, i32
  }
  func.func @transform_5(%arg0: i32) -> (i32, i32) {
    %c0_i32 = arith.constant 0 : i32
    %c0_i32_0 = arith.constant 0 : i32
    %c0_i32_1 = arith.constant 0 : i32
    return %c0_i32, %c0_i32_0 : i32, i32
  }
  func.func @transform_6(%arg0: i32) -> (i32, i32) {
    %c0_i32 = arith.constant 0 : i32
    %c0_i32_0 = arith.constant 0 : i32
    %c0_i32_1 = arith.constant 0 : i32
    return %c0_i32, %c0_i32_0 : i32, i32
  }
  func.func @transform_7(%arg0: i32) -> (i32, i32) {
    %c0_i32 = arith.constant 0 : i32
    %c0_i32_0 = arith.constant 0 : i32
    %c0_i32_1 = arith.constant 0 : i32
    return %c0_i32, %c0_i32_0 : i32, i32
  }
  func.func @transform_8(%arg0: i32) -> (i32, i32) {
    %c0_i32 = arith.constant 0 : i32
    %c0_i32_0 = arith.constant 0 : i32
    %c0_i32_1 = arith.constant 0 : i32
    return %c0_i32, %c0_i32_0 : i32, i32
  }
  func.func @transform_9(%arg0: i32) -> (i32, i32) {
    %c0_i32 = arith.constant 0 : i32
    %c0_i32_0 = arith.constant 0 : i32
    %c0_i32_1 = arith.constant 0 : i32
    return %c0_i32, %c0_i32_0 : i32, i32
  }
  func.func @transform_10(%arg0: i32) -> (i32, i32) {
    %c0_i32 = arith.constant 0 : i32
    %c0_i32_0 = arith.constant 0 : i32
    %c0_i32_1 = arith.constant 0 : i32
    return %c0_i32, %c0_i32_0 : i32, i32
  }
  func.func @transform_11(%arg0: i32) -> (i32, i32) {
    %c0_i32 = arith.constant 0 : i32
    %c0_i32_0 = arith.constant 0 : i32
    return %c0_i32, %arg0 : i32, i32
  }
}

</mosaic_0001>

<llo_original>
// kernel: tpu_custom_call.1
$region0: #{tpu_custom_call.1}
  #allocation0 [shape = 'u32[]', space=smem, size = 0x4, offset = 0x4, fixed_abs, tag = 'smem constant byte address 0x4 - core index']
  #allocation1 [shape = 'u32[144,128]{1,0:T(1,128)}', space=vmem, size = 0x12000, scoped, tag = 'internal scratch']
  #allocation2 [shape = 'f32[1,1]{1,0:T(1,128)S(1)}', space=vmem, size = 0x200, scoped, tag = 'scoped memory for tpu_custom_call.1']
  %s0 = inlined_call_operand.vmem [shape: bf16[2,4], index: 0, kind: input, shape index: {}]
  %s1 = inlined_call_operand.vmem [shape: bf16[64,4], index: 1, kind: input, shape index: {}]
  %s2 = inlined_call_operand.vmem [shape: f32[64,1], index: 2, kind: input, shape index: {}]
  %s3 = inlined_call_operand.vmem [shape: bf16[128,64], index: 3, kind: input, shape index: {}]
  %s4 = inlined_call_operand.vmem [shape: f32[128,1], index: 4, kind: input, shape index: {}]
  %s5 = inlined_call_operand.vmem [shape: bf16[128,128], index: 5, kind: input, shape index: {}]
  %s6 = inlined_call_operand.vmem [shape: f32[128,1], index: 6, kind: input, shape index: {}]
  %s7 = inlined_call_operand.vmem [shape: bf16[128,128], index: 7, kind: input, shape index: {}]
  %s8 = inlined_call_operand.vmem [shape: f32[128,1], index: 8, kind: input, shape index: {}]
  %s9 = inlined_call_operand.vmem [shape: f32[128,1], index: 9, kind: input, shape index: {}]
  %s10 = inlined_call_operand.<no memory space> [shape: f32[1,1], index: 10, kind: input, shape index: {}]
  %s11 = inlined_call_operand.hbm [shape: f32[1,128], index: 11, kind: output, shape index: {}]
  %s12 = sld [smem:[#allocation0]]
  $region54: #{tpu_custom_call.1} parent=0
    _
  %s14 = ssub.s32 1, %s12
  %s15 = scalar_select 0, %s14, %s12
  %v16 = vstv %s10
  %17 = vst [vmem:[#allocation2] sm:$0x1] %v16
  $region1: #{tpu_custom_call.1} parent=0
    #allocation3 [shape = 'u8[512]{0}', space=vmem, size = 0x400, scoped, tag = 'output window, operand 0, single buffered']
    #allocation4 [shape = 's32[1]{0}', space=sflag, size = 0x4, scoped, tag = 'scoped memory for tpu_custom_call.1']
    %18 = vsyncpa [#allocation4], 0
    // Predicated region
    $region2: #{tpu_custom_call.1} parent=1 // pred_check
      _
    $region3: #{tpu_custom_call.1} parent=1 // pred_check_branch
      %20 = sbr.rel (0) target = $region5
    $region4: #{tpu_custom_call.1} parent=1 // pred_region
      _
    $region5: #{tpu_custom_call.1} parent=1 // pred_fallthru
      _
    // Predicated region
    $region6: #{tpu_custom_call.1} parent=1 // pred_check
      _
    $region7: #{tpu_custom_call.1} parent=1 // pred_check_branch
      %22 = sbr.rel (0) target = $region9
    $region8: #{tpu_custom_call.1} parent=1 // pred_region
      _
    $region9: #{tpu_custom_call.1} parent=1 // pred_fallthru
      _
    // Predicated region
    $region10: #{tpu_custom_call.1} parent=1 // pred_check
      _
    $region11: #{tpu_custom_call.1} parent=1 // pred_check_branch
      %24 = sbr.rel (0) target = $region13
    $region12: #{tpu_custom_call.1} parent=1 // pred_region
      _
    $region13: #{tpu_custom_call.1} parent=1 // pred_fallthru
      _
    // Predicated region
    $region14: #{tpu_custom_call.1} parent=1 // pred_check
      _
    $region15: #{tpu_custom_call.1} parent=1 // pred_check_branch
      %26 = sbr.rel (0) target = $region17
    $region16: #{tpu_custom_call.1} parent=1 // pred_region
      _
    $region17: #{tpu_custom_call.1} parent=1 // pred_fallthru
      _
    // Predicated region
    $region18: #{tpu_custom_call.1} parent=1 // pred_check
      _
    $region19: #{tpu_custom_call.1} parent=1 // pred_check_branch
      %28 = sbr.rel (0) target = $region21
    $region20: #{tpu_custom_call.1} parent=1 // pred_region
      _
    $region21: #{tpu_custom_call.1} parent=1 // pred_fallthru
      _
    // Predicated region
    $region22: #{tpu_custom_call.1} parent=1 // pred_check
      _
    $region23: #{tpu_custom_call.1} parent=1 // pred_check_branch
      %30 = sbr.rel (0) target = $region25
    $region24: #{tpu_custom_call.1} parent=1 // pred_region
      _
    $region25: #{tpu_custom_call.1} parent=1 // pred_fallthru
      _
    // Predicated region
    $region26: #{tpu_custom_call.1} parent=1 // pred_check
      _
    $region27: #{tpu_custom_call.1} parent=1 // pred_check_branch
      %32 = sbr.rel (0) target = $region29
    $region28: #{tpu_custom_call.1} parent=1 // pred_region
      _
    $region29: #{tpu_custom_call.1} parent=1 // pred_fallthru
      _
    // Predicated region
    $region30: #{tpu_custom_call.1} parent=1 // pred_check
      _
    $region31: #{tpu_custom_call.1} parent=1 // pred_check_branch
      %34 = sbr.rel (0) target = $region33
    $region32: #{tpu_custom_call.1} parent=1 // pred_region
      _
    $region33: #{tpu_custom_call.1} parent=1 // pred_fallthru
      _
    // Predicated region
    $region34: #{tpu_custom_call.1} parent=1 // pred_check
      _
    $region35: #{tpu_custom_call.1} parent=1 // pred_check_branch
      %36 = sbr.rel (0) target = $region37
    $region36: #{tpu_custom_call.1} parent=1 // pred_region
      _
    $region37: #{tpu_custom_call.1} parent=1 // pred_fallthru
      _
    // Predicated region
    $region38: #{tpu_custom_call.1} parent=1 // pred_check
      _
    $region39: #{tpu_custom_call.1} parent=1 // pred_check_branch
      %38 = sbr.rel (0) target = $region41
    $region40: #{tpu_custom_call.1} parent=1 // pred_region
      _
    $region41: #{tpu_custom_call.1} parent=1 // pred_fallthru
      _
    // Predicated region
    $region42: #{tpu_custom_call.1} parent=1 // pred_check
      _
    $region43: #{tpu_custom_call.1} parent=1 // pred_check_branch
      %40 = sbr.rel (0) target = $region45
    $region44: #{tpu_custom_call.1} parent=1 // pred_region
      _
    $region45: #{tpu_custom_call.1} parent=1 // pred_fallthru
      _
    %v42 = vld [vmem:[%s0] sm:$0x1]
    %v43 = vld [vmem:[%s0 + $0x1] sm:$0x1]
    %v44 = vld [vmem:[%s0 + $0x2] sm:$0x1]
    %v45 = vld [vmem:[%s0 + $0x3] sm:$0x1]
    %v46 = vld [vmem:[%s0 + $0x4] sm:$0x1]
    %v47 = vld [vmem:[%s0 + $0x5] sm:$0x1]
    %v48 = vld [vmem:[%s0 + $0x6] sm:$0x1]
    %v49 = vld [vmem:[%s0 + $0x7] sm:$0x1]
    %v50 = vld [vmem:[%s0 + $0x8] sm:$0x1]
    %v51 = vld [vmem:[%s0 + $0x9] sm:$0x1]
    %v52 = vld [vmem:[%s0 + $0xa] sm:$0x1]
    %v53 = vld [vmem:[%s0 + $0xb] sm:$0x1]
    %v54 = vld [vmem:[%s0 + $0xc] sm:$0x1]
    %v55 = vld [vmem:[%s0 + $0xd] sm:$0x1]
    %v56 = vld [vmem:[%s0 + $0xe] sm:$0x1]
    %v57 = vld [vmem:[%s0 + $0xf] sm:$0x1]
    %v58 = vld [vmem:[%s0 + $0x10] sm:$0x1]
    %v59 = vld [vmem:[%s0 + $0x11] sm:$0x1]
    %v60 = vld [vmem:[%s0 + $0x12] sm:$0x1]
    %v61 = vld [vmem:[%s0 + $0x13] sm:$0x1]
    %v62 = vld [vmem:[%s0 + $0x14] sm:$0x1]
    %v63 = vld [vmem:[%s0 + $0x15] sm:$0x1]
    %v64 = vld [vmem:[%s0 + $0x16] sm:$0x1]
    %v65 = vld [vmem:[%s0 + $0x17] sm:$0x1]
    %v66 = vld [vmem:[%s0 + $0x18] sm:$0x1]
    %v67 = vld [vmem:[%s0 + $0x19] sm:$0x1]
    %v68 = vld [vmem:[%s0 + $0x1a] sm:$0x1]
    %v69 = vld [vmem:[%s0 + $0x1b] sm:$0x1]
    %v70 = vld [vmem:[%s0 + $0x1c] sm:$0x1]
    %v71 = vld [vmem:[%s0 + $0x1d] sm:$0x1]
    %v72 = vld [vmem:[%s0 + $0x1e] sm:$0x1]
    %v73 = vld [vmem:[%s0 + $0x1f] sm:$0x1]
    %v74 = vld [vmem:[%s0 + $0x20] sm:$0x1]
    %v75 = vld [vmem:[%s0 + $0x21] sm:$0x1]
    %v76 = vld [vmem:[%s0 + $0x22] sm:$0x1]
    %v77 = vld [vmem:[%s0 + $0x23] sm:$0x1]
    %v78 = vld [vmem:[%s0 + $0x24] sm:$0x1]
    %v79 = vld [vmem:[%s0 + $0x25] sm:$0x1]
    %v80 = vld [vmem:[%s0 + $0x26] sm:$0x1]
    %v81 = vld [vmem:[%s0 + $0x27] sm:$0x1]
    %v82 = vld [vmem:[%s0 + $0x28] sm:$0x1]
    %v83 = vld [vmem:[%s0 + $0x29] sm:$0x1]
    %v84 = vld [vmem:[%s0 + $0x2a] sm:$0x1]
    %v85 = vld [vmem:[%s0 + $0x2b] sm:$0x1]
    %v86 = vld [vmem:[%s0 + $0x2c] sm:$0x1]
    %v87 = vld [vmem:[%s0 + $0x2d] sm:$0x1]
    %v88 = vld [vmem:[%s0 + $0x2e] sm:$0x1]
    %v89 = vld [vmem:[%s0 + $0x2f] sm:$0x1]
    %v90 = vld [vmem:[%s0 + $0x30] sm:$0x1]
    %v91 = vld [vmem:[%s0 + $0x31] sm:$0x1]
    %v92 = vld [vmem:[%s0 + $0x32] sm:$0x1]
    %v93 = vld [vmem:[%s0 + $0x33] sm:$0x1]
    %v94 = vld [vmem:[%s0 + $0x34] sm:$0x1]
    %v95 = vld [vmem:[%s0 + $0x35] sm:$0x1]
    %v96 = vld [vmem:[%s0 + $0x36] sm:$0x1]
    %v97 = vld [vmem:[%s0 + $0x37] sm:$0x1]
    %v98 = vld [vmem:[%s0 + $0x38] sm:$0x1]
    %v99 = vld [vmem:[%s0 + $0x39] sm:$0x1]
    %v100 = vld [vmem:[%s0 + $0x3a] sm:$0x1]
    %v101 = vld [vmem:[%s0 + $0x3b] sm:$0x1]
    %v102 = vld [vmem:[%s0 + $0x3c] sm:$0x1]
    %v103 = vld [vmem:[%s0 + $0x3d] sm:$0x1]
    %v104 = vld [vmem:[%s0 + $0x3e] sm:$0x1]
    %v105 = vld [vmem:[%s0 + $0x3f] sm:$0x1]
    %v106 = vld [vmem:[%s1] sm:$0xf]
    %v107 = vld [vmem:[%s1 + $0x4] sm:$0xf]
    %v108 = vld [vmem:[%s1 + $0x8] sm:$0xf]
    %v109 = vld [vmem:[%s1 + $0xc] sm:$0xf]
    %v110 = vld [vmem:[%s1 + $0x10] sm:$0xf]
    %v111 = vld [vmem:[%s1 + $0x14] sm:$0xf]
    %v112 = vld [vmem:[%s1 + $0x18] sm:$0xf]
    %v113 = vld [vmem:[%s1 + $0x1c] sm:$0xf]
    %v114 = vld [vmem:[%s2] sm:$0xff]
    %v115 = vld [vmem:[%s2 + $0x8] sm:$0xff]
    %v116 = vld [vmem:[%s2 + $0x10] sm:$0xff]
    %v117 = vld [vmem:[%s2 + $0x18] sm:$0xff]
    %v118 = vld [vmem:[%s2 + $0x20] sm:$0xff]
    %v119 = vld [vmem:[%s2 + $0x28] sm:$0xff]
    %v120 = vld [vmem:[%s2 + $0x30] sm:$0xff]
    %v121 = vld [vmem:[%s2 + $0x38] sm:$0xff]
    %123 = vset.pattern.permute.xlu0 0
    %124 = vperm.xlu0 %123, %v114
    %v125 = vpop.permute.xlu0 %124
    %128 = vset.pattern.permute.xlu0 0
    %129 = vperm.xlu0 %128, %v115
    %v130 = vpop.permute.xlu0 %129
    %133 = vset.pattern.permute.xlu0 0
    %134 = vperm.xlu0 %133, %v116
    %v135 = vpop.permute.xlu0 %134
    %138 = vset.pattern.permute.xlu0 0
    %139 = vperm.xlu0 %138, %v117
    %v140 = vpop.permute.xlu0 %139
    %143 = vset.pattern.permute.xlu0 0
    %144 = vperm.xlu0 %143, %v118
    %v145 = vpop.permute.xlu0 %144
    %148 = vset.pattern.permute.xlu0 0
    %149 = vperm.xlu0 %148, %v119
    %v150 = vpop.permute.xlu0 %149
    %153 = vset.pattern.permute.xlu0 0
    %154 = vperm.xlu0 %153, %v120
    %v155 = vpop.permute.xlu0 %154
    %158 = vset.pattern.permute.xlu0 0
    %159 = vperm.xlu0 %158, %v121
    %v160 = vpop.permute.xlu0 %159
    %v170 = vunpack.c.l.b16 %v106
    %v171 = vunpack.c.l.b16 %v107
    %v172 = vunpack.c.l.b16 %v108
    %v173 = vunpack.c.l.b16 %v109
    %v174 = vunpack.c.l.b16 %v110
    %v175 = vunpack.c.l.b16 %v111
    %v176 = vunpack.c.l.b16 %v112
    %v177 = vunpack.c.l.b16 %v113
    %v178 = vpack.c.b16 %v171, %v170
    %v179 = vpack.c.b16 %v173, %v172
    %v180 = vpack.c.b16 %v175, %v174
    %v181 = vpack.c.b16 %v177, %v176
    %v246 = vcombine.low %v42, %v43
    %v247 = vcombine.low %v44, %v45
    %v248 = vcombine.low %v46, %v47
    %v249 = vcombine.low %v48, %v49
    %v251 = vunpack.c.l.s4 1966171168
    %v252 = vunpack.c.0.s8 %v251
    %v253 = vlaneseq
    %v254 = vshrl.u32 %v253, 7
    %v255 = vsub.s32 %v252, %v254
    %v256 = vrot.slane %v246, %v255
    %v258 = vunpack.c.l.s4 1966171168
    %v259 = vunpack.c.0.s8 %v258
    %v260 = vlaneseq
    %v261 = vshrl.u32 %v260, 7
    %v262 = vsub.s32 %v259, %v261
    %v263 = vrot.slane %v247, %v262
    %v265 = vunpack.c.l.s4 1966171168
    %v266 = vunpack.c.0.s8 %v265
    %v267 = vlaneseq
    %v268 = vshrl.u32 %v267, 7
    %v269 = vsub.s32 %v266, %v268
    %v270 = vrot.slane %v248, %v269
    %v272 = vunpack.c.l.s4 1966171168
    %v273 = vunpack.c.0.s8 %v272
    %v274 = vlaneseq
    %v275 = vshrl.u32 %v274, 7
    %v276 = vsub.s32 %v273, %v275
    %v277 = vrot.slane %v249, %v276
    %v278 = vcombine.low %v256, %v263
    %v279 = vcombine.low %v270, %v277
    %v281 = vunpack.c.l.s4 1966171168
    %v282 = vunpack.c.0.s8 %v281
    %v283 = vlaneseq
    %v284 = vshrl.u32 %v283, 7
    %v285 = vsub.s32 %v282, %v284
    %v286 = vrot.slane %v278, %v285
    %v288 = vunpack.c.l.s4 1966171168
    %v289 = vunpack.c.0.s8 %v288
    %v290 = vlaneseq
    %v291 = vshrl.u32 %v290, 7
    %v292 = vsub.s32 %v289, %v291
    %v293 = vrot.slane %v279, %v292
    %v294 = vcombine.low %v286, %v293
    %v295 = vcombine.low %v50, %v51
    %v296 = vcombine.low %v52, %v53
    %v297 = vcombine.low %v54, %v55
    %v298 = vcombine.low %v56, %v57
    %v300 = vunpack.c.l.s4 1966171168
    %v301 = vunpack.c.0.s8 %v300
    %v302 = vlaneseq
    %v303 = vshrl.u32 %v302, 7
    %v304 = vsub.s32 %v301, %v303
    %v305 = vrot.slane %v295, %v304
    %v307 = vunpack.c.l.s4 1966171168
    %v308 = vunpack.c.0.s8 %v307
    %v309 = vlaneseq
    %v310 = vshrl.u32 %v309, 7
    %v311 = vsub.s32 %v308, %v310
    %v312 = vrot.slane %v296, %v311
    %v314 = vunpack.c.l.s4 1966171168
    %v315 = vunpack.c.0.s8 %v314
    %v316 = vlaneseq
    %v317 = vshrl.u32 %v316, 7
    %v318 = vsub.s32 %v315, %v317
    %v319 = vrot.slane %v297, %v318
    %v321 = vunpack.c.l.s4 1966171168
    %v322 = vunpack.c.0.s8 %v321
    %v323 = vlaneseq
    %v324 = vshrl.u32 %v323, 7
    %v325 = vsub.s32 %v322, %v324
    %v326 = vrot.slane %v298, %v325
    %v327 = vcombine.low %v305, %v312
    %v328 = vcombine.low %v319, %v326
    %v330 = vunpack.c.l.s4 1966171168
    %v331 = vunpack.c.0.s8 %v330
    %v332 = vlaneseq
    %v333 = vshrl.u32 %v332, 7
    %v334 = vsub.s32 %v331, %v333
    %v335 = vrot.slane %v327, %v334
    %v337 = vunpack.c.l.s4 1966171168
    %v338 = vunpack.c.0.s8 %v337
    %v339 = vlaneseq
    %v340 = vshrl.u32 %v339, 7
    %v341 = vsub.s32 %v338, %v340
    %v342 = vrot.slane %v328, %v341
    %v343 = vcombine.low %v335, %v342
    %v344 = vcombine.low %v58, %v59
    %v345 = vcombine.low %v60, %v61
    %v346 = vcombine.low %v62, %v63
    %v347 = vcombine.low %v64, %v65
    %v349 = vunpack.c.l.s4 1966171168
    %v350 = vunpack.c.0.s8 %v349
    %v351 = vlaneseq
    %v352 = vshrl.u32 %v351, 7
    %v353 = vsub.s32 %v350, %v352
    %v354 = vrot.slane %v344, %v353
    %v356 = vunpack.c.l.s4 1966171168
    %v357 = vunpack.c.0.s8 %v356
    %v358 = vlaneseq
    %v359 = vshrl.u32 %v358, 7
    %v360 = vsub.s32 %v357, %v359
    %v361 = vrot.slane %v345, %v360
    %v363 = vunpack.c.l.s4 1966171168
    %v364 = vunpack.c.0.s8 %v363
    %v365 = vlaneseq
    %v366 = vshrl.u32 %v365, 7
    %v367 = vsub.s32 %v364, %v366
    %v368 = vrot.slane %v346, %v367
    %v370 = vunpack.c.l.s4 1966171168
    %v371 = vunpack.c.0.s8 %v370
    %v372 = vlaneseq
    %v373 = vshrl.u32 %v372, 7
    %v374 = vsub.s32 %v371, %v373
    %v375 = vrot.slane %v347, %v374
    %v376 = vcombine.low %v354, %v361
    %v377 = vcombine.low %v368, %v375
    %v379 = vunpack.c.l.s4 1966171168
    %v380 = vunpack.c.0.s8 %v379
    %v381 = vlaneseq
    %v382 = vshrl.u32 %v381, 7
    %v383 = vsub.s32 %v380, %v382
    %v384 = vrot.slane %v376, %v383
    %v386 = vunpack.c.l.s4 1966171168
    %v387 = vunpack.c.0.s8 %v386
    %v388 = vlaneseq
    %v389 = vshrl.u32 %v388, 7
    %v390 = vsub.s32 %v387, %v389
    %v391 = vrot.slane %v377, %v390
    %v392 = vcombine.low %v384, %v391
    %v393 = vcombine.low %v66, %v67
    %v394 = vcombine.low %v68, %v69
    %v395 = vcombine.low %v70, %v71
    %v396 = vcombine.low %v72, %v73
    %v398 = vunpack.c.l.s4 1966171168
    %v399 = vunpack.c.0.s8 %v398
    %v400 = vlaneseq
    %v401 = vshrl.u32 %v400, 7
    %v402 = vsub.s32 %v399, %v401
    %v403 = vrot.slane %v393, %v402
    %v405 = vunpack.c.l.s4 1966171168
    %v406 = vunpack.c.0.s8 %v405
    %v407 = vlaneseq
    %v408 = vshrl.u32 %v407, 7
    %v409 = vsub.s32 %v406, %v408
    %v410 = vrot.slane %v394, %v409
    %v412 = vunpack.c.l.s4 1966171168
    %v413 = vunpack.c.0.s8 %v412
    %v414 = vlaneseq
    %v415 = vshrl.u32 %v414, 7
    %v416 = vsub.s32 %v413, %v415
    %v417 = vrot.slane %v395, %v416
    %v419 = vunpack.c.l.s4 1966171168
    %v420 = vunpack.c.0.s8 %v419
    %v421 = vlaneseq
    %v422 = vshrl.u32 %v421, 7
    %v423 = vsub.s32 %v420, %v422
    %v424 = vrot.slane %v396, %v423
    %v425 = vcombine.low %v403, %v410
    %v426 = vcombine.low %v417, %v424
    %v428 = vunpack.c.l.s4 1966171168
    %v429 = vunpack.c.0.s8 %v428
    %v430 = vlaneseq
    %v431 = vshrl.u32 %v430, 7
    %v432 = vsub.s32 %v429, %v431
    %v433 = vrot.slane %v425, %v432
    %v435 = vunpack.c.l.s4 1966171168
    %v436 = vunpack.c.0.s8 %v435
    %v437 = vlaneseq
    %v438 = vshrl.u32 %v437, 7
    %v439 = vsub.s32 %v436, %v438
    %v440 = vrot.slane %v426, %v439
    %v441 = vcombine.low %v433, %v440
    %v442 = vcombine.low %v74, %v75
    %v443 = vcombine.low %v76, %v77
    %v444 = vcombine.low %v78, %v79
    %v445 = vcombine.low %v80, %v81
    %v447 = vunpack.c.l.s4 1966171168
    %v448 = vunpack.c.0.s8 %v447
    %v449 = vlaneseq
    %v450 = vshrl.u32 %v449, 7
    %v451 = vsub.s32 %v448, %v450
    %v452 = vrot.slane %v442, %v451
    %v454 = vunpack.c.l.s4 1966171168
    %v455 = vunpack.c.0.s8 %v454
    %v456 = vlaneseq
    %v457 = vshrl.u32 %v456, 7
    %v458 = vsub.s32 %v455, %v457
    %v459 = vrot.slane %v443, %v458
    %v461 = vunpack.c.l.s4 1966171168
    %v462 = vunpack.c.0.s8 %v461
    %v463 = vlaneseq
    %v464 = vshrl.u32 %v463, 7
    %v465 = vsub.s32 %v462, %v464
    %v466 = vrot.slane %v444, %v465
    %v468 = vunpack.c.l.s4 1966171168
    %v469 = vunpack.c.0.s8 %v468
    %v470 = vlaneseq
    %v471 = vshrl.u32 %v470, 7
    %v472 = vsub.s32 %v469, %v471
    %v473 = vrot.slane %v445, %v472
    %v474 = vcombine.low %v452, %v459
    %v475 = vcombine.low %v466, %v473
    %v477 = vunpack.c.l.s4 1966171168
    %v478 = vunpack.c.0.s8 %v477
    %v479 = vlaneseq
    %v480 = vshrl.u32 %v479, 7
    %v481 = vsub.s32 %v478, %v480
    %v482 = vrot.slane %v474, %v481
    %v484 = vunpack.c.l.s4 1966171168
    %v485 = vunpack.c.0.s8 %v484
    %v486 = vlaneseq
    %v487 = vshrl.u32 %v486, 7
    %v488 = vsub.s32 %v485, %v487
    %v489 = vrot.slane %v475, %v488
    %v490 = vcombine.low %v482, %v489
    %v491 = vcombine.low %v82, %v83
    %v492 = vcombine.low %v84, %v85
    %v493 = vcombine.low %v86, %v87
    %v494 = vcombine.low %v88, %v89
    %v496 = vunpack.c.l.s4 1966171168
    %v497 = vunpack.c.0.s8 %v496
    %v498 = vlaneseq
    %v499 = vshrl.u32 %v498, 7
    %v500 = vsub.s32 %v497, %v499
    %v501 = vrot.slane %v491, %v500
    %v503 = vunpack.c.l.s4 1966171168
    %v504 = vunpack.c.0.s8 %v503
    %v505 = vlaneseq
    %v506 = vshrl.u32 %v505, 7
    %v507 = vsub.s32 %v504, %v506
    %v508 = vrot.slane %v492, %v507
    %v510 = vunpack.c.l.s4 1966171168
    %v511 = vunpack.c.0.s8 %v510
    %v512 = vlaneseq
    %v513 = vshrl.u32 %v512, 7
    %v514 = vsub.s32 %v511, %v513
    %v515 = vrot.slane %v493, %v514
    %v517 = vunpack.c.l.s4 1966171168
    %v518 = vunpack.c.0.s8 %v517
    %v519 = vlaneseq
    %v520 = vshrl.u32 %v519, 7
    %v521 = vsub.s32 %v518, %v520
    %v522 = vrot.slane %v494, %v521
    %v523 = vcombine.low %v501, %v508
    %v524 = vcombine.low %v515, %v522
    %v526 = vunpack.c.l.s4 1966171168
    %v527 = vunpack.c.0.s8 %v526
    %v528 = vlaneseq
    %v529 = vshrl.u32 %v528, 7
    %v530 = vsub.s32 %v527, %v529
    %v531 = vrot.slane %v523, %v530
    %v533 = vunpack.c.l.s4 1966171168
    %v534 = vunpack.c.0.s8 %v533
    %v535 = vlaneseq
    %v536 = vshrl.u32 %v535, 7
    %v537 = vsub.s32 %v534, %v536
    %v538 = vrot.slane %v524, %v537
    %v539 = vcombine.low %v531, %v538
    %v540 = vcombine.low %v90, %v91
    %v541 = vcombine.low %v92, %v93
    %v542 = vcombine.low %v94, %v95
    %v543 = vcombine.low %v96, %v97
    %v545 = vunpack.c.l.s4 1966171168
    %v546 = vunpack.c.0.s8 %v545
    %v547 = vlaneseq
    %v548 = vshrl.u32 %v547, 7
    %v549 = vsub.s32 %v546, %v548
    %v550 = vrot.slane %v540, %v549
    %v552 = vunpack.c.l.s4 1966171168
    %v553 = vunpack.c.0.s8 %v552
    %v554 = vlaneseq
    %v555 = vshrl.u32 %v554, 7
    %v556 = vsub.s32 %v553, %v555
    %v557 = vrot.slane %v541, %v556
    %v559 = vunpack.c.l.s4 1966171168
    %v560 = vunpack.c.0.s8 %v559
    %v561 = vlaneseq
    %v562 = vshrl.u32 %v561, 7
    %v563 = vsub.s32 %v560, %v562
    %v564 = vrot.slane %v542, %v563
    %v566 = vunpack.c.l.s4 1966171168
    %v567 = vunpack.c.0.s8 %v566
    %v568 = vlaneseq
    %v569 = vshrl.u32 %v568, 7
    %v570 = vsub.s32 %v567, %v569
    %v571 = vrot.slane %v543, %v570
    %v572 = vcombine.low %v550, %v557
    %v573 = vcombine.low %v564, %v571
    %v575 = vunpack.c.l.s4 1966171168
    %v576 = vunpack.c.0.s8 %v575
    %v577 = vlaneseq
    %v578 = vshrl.u32 %v577, 7
    %v579 = vsub.s32 %v576, %v578
    %v580 = vrot.slane %v572, %v579
    %v582 = vunpack.c.l.s4 1966171168
    %v583 = vunpack.c.0.s8 %v582
    %v584 = vlaneseq
    %v585 = vshrl.u32 %v584, 7
    %v586 = vsub.s32 %v583, %v585
    %v587 = vrot.slane %v573, %v586
    %v588 = vcombine.low %v580, %v587
    %v589 = vcombine.low %v98, %v99
    %v590 = vcombine.low %v100, %v101
    %v591 = vcombine.low %v102, %v103
    %v592 = vcombine.low %v104, %v105
    %v594 = vunpack.c.l.s4 1966171168
    %v595 = vunpack.c.0.s8 %v594
    %v596 = vlaneseq
    %v597 = vshrl.u32 %v596, 7
    %v598 = vsub.s32 %v595, %v597
    %v599 = vrot.slane %v589, %v598
    %v601 = vunpack.c.l.s4 1966171168
    %v602 = vunpack.c.0.s8 %v601
    %v603 = vlaneseq
    %v604 = vshrl.u32 %v603, 7
    %v605 = vsub.s32 %v602, %v604
    %v606 = vrot.slane %v590, %v605
    %v608 = vunpack.c.l.s4 1966171168
    %v609 = vunpack.c.0.s8 %v608
    %v610 = vlaneseq
    %v611 = vshrl.u32 %v610, 7
    %v612 = vsub.s32 %v609, %v611
    %v613 = vrot.slane %v591, %v612
    %v615 = vunpack.c.l.s4 1966171168
    %v616 = vunpack.c.0.s8 %v615
    %v617 = vlaneseq
    %v618 = vshrl.u32 %v617, 7
    %v619 = vsub.s32 %v616, %v618
    %v620 = vrot.slane %v592, %v619
    %v621 = vcombine.low %v599, %v606
    %v622 = vcombine.low %v613, %v620
    %v624 = vunpack.c.l.s4 1966171168
    %v625 = vunpack.c.0.s8 %v624
    %v626 = vlaneseq
    %v627 = vshrl.u32 %v626, 7
    %v628 = vsub.s32 %v625, %v627
    %v629 = vrot.slane %v621, %v628
    %v631 = vunpack.c.l.s4 1966171168
    %v632 = vunpack.c.0.s8 %v631
    %v633 = vlaneseq
    %v634 = vshrl.u32 %v633, 7
    %v635 = vsub.s32 %v632, %v634
    %v636 = vrot.slane %v622, %v635
    %v637 = vcombine.low %v629, %v636
    %vm638 = vcmask 31744
    %v640 = vsel %vm638, %v178, 0
    %v643 = vsel %vm638, %v179, 0
    %v646 = vsel %vm638, %v180, 0
    %v649 = vsel %vm638, %v181, 0
    %v652 = vsel %vm638, %v294, 0
    %v655 = vsel %vm638, %v343, 0
    %v658 = vsel %vm638, %v392, 0
    %v661 = vsel %vm638, %v441, 0
    %v664 = vsel %vm638, %v490, 0
    %v667 = vsel %vm638, %v539, 0
    %v670 = vsel %vm638, %v588, 0
    %v673 = vsel %vm638, %v637, 0
    %675 = vmatprep.subr.bf16.mxu0 0
    %676 = vmatpush1.bf16.xpose.msra.mxu0 %v652
    %677 = vmatprep.subr.bf16.mxu0 0
    %678 = vmatpush1.bf16.xpose.msra.mxu0 %v655
    %679 = vmatprep.subr.bf16.mxu0 0
    %680 = vmatpush1.bf16.xpose.msra.mxu0 %v658
    %681 = vmatprep.subr.bf16.mxu0 0
    %682 = vmatpush1.bf16.xpose.msra.mxu0 %v661
    %683 = vmatprep.subr.bf16.mxu0 0
    %684 = vmatpush1.bf16.xpose.msra.mxu0 %v664
    %685 = vmatprep.subr.bf16.mxu0 0
    %686 = vmatpush1.bf16.xpose.msra.mxu0 %v667
    %687 = vmatprep.subr.bf16.mxu0 0
    %688 = vmatpush1.bf16.xpose.msra.mxu0 %v670
    %689 = vmatprep.subr.bf16.mxu0 0
    %690 = vmatpush1.bf16.xpose.msra.mxu0 %v673
    %691 = vmatprep.subr.bf16.mxu0 0
    %692 = vmatpush1.bf16.xpose.msra.mxu0 0
    %693 = vmatprep.subr.bf16.mxu0 0
    %694 = vmatpush1.bf16.xpose.msra.mxu0 0
    %695 = vmatprep.subr.bf16.mxu0 0
    %696 = vmatpush1.bf16.xpose.msra.mxu0 0
    %697 = vmatprep.subr.bf16.mxu0 0
    %698 = vmatpush1.bf16.xpose.msra.mxu0 0
    %699 = vmatprep.subr.bf16.mxu0 0
    %700 = vmatpush1.bf16.xpose.msra.mxu0 0
    %701 = vmatprep.subr.bf16.mxu0 0
    %702 = vmatpush1.bf16.xpose.msra.mxu0 0
    %703 = vmatprep.subr.bf16.mxu0 0
    %704 = vmatpush1.bf16.xpose.msra.mxu0 0
    %705 = vmatprep.subr.bf16.mxu0 0
    %706 = vmatpush1.bf16.xpose.msra.mxu0 0
    %707 = vmatprep.mubr.bf16.mxu0 0
    %708 = vmatmul.mubr.bf16.gmra.mrb[0].mxu0 %v640
    %v709 = vpop.f32.mrb[0].mxu0
    %v710 = vadd.f32 %v125, %v709
    %v711 = vpop.f32.mrb[0].mxu0
    %v712 = vpop.f32.mrb[0].mxu0
    %v713 = vadd.f32 %v130, %v712
    %v714 = vpop.f32.mrb[0].mxu0
    %715 = vmatprep.mubr.bf16.mxu0 0
    %716 = vmatmul.mubr.bf16.gmra.mrb[0].mxu0 %v643
    %v717 = vpop.f32.mrb[0].mxu0
    %v718 = vadd.f32 %v135, %v717
    %v719 = vpop.f32.mrb[0].mxu0
    %v720 = vpop.f32.mrb[0].mxu0
    %v721 = vadd.f32 %v140, %v720
    %v722 = vpop.f32.mrb[0].mxu0
    %723 = vmatprep.mubr.bf16.mxu0 0
    %724 = vmatmul.mubr.bf16.gmra.mrb[0].mxu0 %v646
    %v725 = vpop.f32.mrb[0].mxu0
    %v726 = vadd.f32 %v145, %v725
    %v727 = vpop.f32.mrb[0].mxu0
    %v728 = vpop.f32.mrb[0].mxu0
    %v729 = vadd.f32 %v150, %v728
    %v730 = vpop.f32.mrb[0].mxu0
    %731 = vmatprep.mubr.bf16.mxu0 0
    %732 = vmatmul.mubr.bf16.gmra.mrb[0].mxu0 %v649
    %v733 = vpop.f32.mrb[0].mxu0
    %v734 = vadd.f32 %v155, %v733
    %v735 = vpop.f32.mrb[0].mxu0
    %v736 = vpop.f32.mrb[0].mxu0
    %v737 = vadd.f32 %v160, %v736
    %v738 = vpop.f32.mrb[0].mxu0
    %739 = vdwg.mxu0
    %v740 = vmax.f32 %v710, 0.0
    %v741 = vmax.f32 %v713, 0.0
    %v742 = vmax.f32 %v718, 0.0
    %v743 = vmax.f32 %v721, 0.0
    %v744 = vmax.f32 %v726, 0.0
    %v745 = vmax.f32 %v729, 0.0
    %v746 = vmax.f32 %v734, 0.0
    %v747 = vmax.f32 %v737, 0.0
    %v748 = vld [vmem:[%s3] sm:$0xf]
    %v749 = vld [vmem:[%s3 + $0x4] sm:$0xf]
    %v750 = vld [vmem:[%s3 + $0x8] sm:$0xf]
    %v751 = vld [vmem:[%s3 + $0xc] sm:$0xf]
    %v752 = vld [vmem:[%s3 + $0x10] sm:$0xf]
    %v753 = vld [vmem:[%s3 + $0x14] sm:$0xf]
    %v754 = vld [vmem:[%s3 + $0x18] sm:$0xf]
    %v755 = vld [vmem:[%s3 + $0x1c] sm:$0xf]
    %v756 = vld [vmem:[%s3 + $0x20] sm:$0xf]
    %v757 = vld [vmem:[%s3 + $0x24] sm:$0xf]
    %v758 = vld [vmem:[%s3 + $0x28] sm:$0xf]
    %v759 = vld [vmem:[%s3 + $0x2c] sm:$0xf]
    %v760 = vld [vmem:[%s3 + $0x30] sm:$0xf]
    %v761 = vld [vmem:[%s3 + $0x34] sm:$0xf]
    %v762 = vld [vmem:[%s3 + $0x38] sm:$0xf]
    %v763 = vld [vmem:[%s3 + $0x3c] sm:$0xf]
    %v764 = vpack.c.bf16 %v741, %v740
    %v765 = vpack.c.bf16 %v743, %v742
    %v766 = vpack.c.bf16 %v745, %v744
    %v767 = vpack.c.bf16 %v747, %v746
    %v768 = vld [vmem:[%s4] sm:$0xff]
    %v769 = vld [vmem:[%s4 + $0x8] sm:$0xff]
    %v770 = vld [vmem:[%s4 + $0x10] sm:$0xff]
    %v771 = vld [vmem:[%s4 + $0x18] sm:$0xff]
    %v772 = vld [vmem:[%s4 + $0x20] sm:$0xff]
    %v773 = vld [vmem:[%s4 + $0x28] sm:$0xff]
    %v774 = vld [vmem:[%s4 + $0x30] sm:$0xff]
    %v775 = vld [vmem:[%s4 + $0x38] sm:$0xff]
    %v776 = vld [vmem:[%s4 + $0x40] sm:$0xff]
    %v777 = vld [vmem:[%s4 + $0x48] sm:$0xff]
    %v778 = vld [vmem:[%s4 + $0x50] sm:$0xff]
    %v779 = vld [vmem:[%s4 + $0x58] sm:$0xff]
    %v780 = vld [vmem:[%s4 + $0x60] sm:$0xff]
    %v781 = vld [vmem:[%s4 + $0x68] sm:$0xff]
    %v782 = vld [vmem:[%s4 + $0x70] sm:$0xff]
    %v783 = vld [vmem:[%s4 + $0x78] sm:$0xff]
    %785 = vset.pattern.permute.xlu0 0
    %786 = vperm.xlu0 %785, %v768
    %v787 = vpop.permute.xlu0 %786
    %790 = vset.pattern.permute.xlu0 0
    %791 = vperm.xlu0 %790, %v769
    %v792 = vpop.permute.xlu0 %791
    %795 = vset.pattern.permute.xlu0 0
    %796 = vperm.xlu0 %795, %v770
    %v797 = vpop.permute.xlu0 %796
    %800 = vset.pattern.permute.xlu0 0
    %801 = vperm.xlu0 %800, %v771
    %v802 = vpop.permute.xlu0 %801
    %805 = vset.pattern.permute.xlu0 0
    %806 = vperm.xlu0 %805, %v772
    %v807 = vpop.permute.xlu0 %806
    %810 = vset.pattern.permute.xlu0 0
    %811 = vperm.xlu0 %810, %v773
    %v812 = vpop.permute.xlu0 %811
    %815 = vset.pattern.permute.xlu0 0
    %816 = vperm.xlu0 %815, %v774
    %v817 = vpop.permute.xlu0 %816
    %820 = vset.pattern.permute.xlu0 0
    %821 = vperm.xlu0 %820, %v775
    %v822 = vpop.permute.xlu0 %821
    %825 = vset.pattern.permute.xlu0 0
    %826 = vperm.xlu0 %825, %v776
    %v827 = vpop.permute.xlu0 %826
    %830 = vset.pattern.permute.xlu0 0
    %831 = vperm.xlu0 %830, %v777
    %v832 = vpop.permute.xlu0 %831
    %835 = vset.pattern.permute.xlu0 0
    %836 = vperm.xlu0 %835, %v778
    %v837 = vpop.permute.xlu0 %836
    %840 = vset.pattern.permute.xlu0 0
    %841 = vperm.xlu0 %840, %v779
    %v842 = vpop.permute.xlu0 %841
    %845 = vset.pattern.permute.xlu0 0
    %846 = vperm.xlu0 %845, %v780
    %v847 = vpop.permute.xlu0 %846
    %850 = vset.pattern.permute.xlu0 0
    %851 = vperm.xlu0 %850, %v781
    %v852 = vpop.permute.xlu0 %851
    %855 = vset.pattern.permute.xlu0 0
    %856 = vperm.xlu0 %855, %v782
    %v857 = vpop.permute.xlu0 %856
    %860 = vset.pattern.permute.xlu0 0
    %861 = vperm.xlu0 %860, %v783
    %v862 = vpop.permute.xlu0 %861
    %v880 = vunpack.c.l.b16 %v748
    %v881 = vunpack.c.l.b16 %v749
    %v882 = vunpack.c.l.b16 %v750
    %v883 = vunpack.c.l.b16 %v751
    %v884 = vunpack.c.l.b16 %v752
    %v885 = vunpack.c.l.b16 %v753
    %v886 = vunpack.c.l.b16 %v754
    %v887 = vunpack.c.l.b16 %v755
    %v888 = vunpack.c.l.b16 %v756
    %v889 = vunpack.c.l.b16 %v757
    %v890 = vunpack.c.l.b16 %v758
    %v891 = vunpack.c.l.b16 %v759
    %v892 = vunpack.c.l.b16 %v760
    %v893 = vunpack.c.l.b16 %v761
    %v894 = vunpack.c.l.b16 %v762
    %v895 = vunpack.c.l.b16 %v763
    %v896 = vpack.c.b16 %v881, %v880
    %v897 = vpack.c.b16 %v883, %v882
    %v898 = vpack.c.b16 %v885, %v884
    %v899 = vpack.c.b16 %v887, %v886
    %v900 = vpack.c.b16 %v889, %v888
    %v901 = vpack.c.b16 %v891, %v890
    %v902 = vpack.c.b16 %v893, %v892
    %v903 = vpack.c.b16 %v895, %v894
    %vm904 = vcmask 523264
    %v906 = vsel %vm904, %v896, 0
    %v909 = vsel %vm904, %v897, 0
    %v912 = vsel %vm904, %v898, 0
    %v915 = vsel %vm904, %v899, 0
    %v918 = vsel %vm904, %v900, 0
    %v921 = vsel %vm904, %v901, 0
    %v924 = vsel %vm904, %v902, 0
    %v927 = vsel %vm904, %v903, 0
    %929 = vmatprep.subr.bf16.mxu0 0
    %930 = vmatpush1.bf16.msra.mxu0 %v764
    %931 = vmatprep.subr.bf16.mxu0 0
    %932 = vmatpush1.bf16.msra.mxu0 %v765
    %933 = vmatprep.subr.bf16.mxu0 0
    %934 = vmatpush1.bf16.msra.mxu0 %v766
    %935 = vmatprep.subr.bf16.mxu0 0
    %936 = vmatpush1.bf16.msra.mxu0 %v767
    %937 = vmatprep.subr.bf16.mxu0 0
    %938 = vmatpush1.bf16.msra.mxu0 0
    %939 = vmatprep.subr.bf16.mxu0 0
    %940 = vmatpush1.bf16.msra.mxu0 0
    %941 = vmatprep.subr.bf16.mxu0 0
    %942 = vmatpush1.bf16.msra.mxu0 0
    %943 = vmatprep.subr.bf16.mxu0 0
    %944 = vmatpush1.bf16.msra.mxu0 0
    %945 = vmatprep.subr.bf16.mxu0 0
    %946 = vmatpush1.bf16.msra.mxu0 0
    %947 = vmatprep.subr.bf16.mxu0 0
    %948 = vmatpush1.bf16.msra.mxu0 0
    %949 = vmatprep.subr.bf16.mxu0 0
    %950 = vmatpush1.bf16.msra.mxu0 0
    %951 = vmatprep.subr.bf16.mxu0 0
    %952 = vmatpush1.bf16.msra.mxu0 0
    %953 = vmatprep.subr.bf16.mxu0 0
    %954 = vmatpush1.bf16.msra.mxu0 0
    %955 = vmatprep.subr.bf16.mxu0 0
    %956 = vmatpush1.bf16.msra.mxu0 0
    %957 = vmatprep.subr.bf16.mxu0 0
    %958 = vmatpush1.bf16.msra.mxu0 0
    %959 = vmatprep.subr.bf16.mxu0 0
    %960 = vmatpush1.bf16.msra.mxu0 0
    %961 = vmatprep.mubr.bf16.mxu0 0
    %962 = vmatmul.mubr.bf16.gmra.mrb[0].mxu0 %v906
    %v963 = vpop.f32.mrb[0].mxu0
    %v964 = vadd.f32 %v787, %v963
    %v965 = vpop.f32.mrb[0].mxu0
    %v966 = vpop.f32.mrb[0].mxu0
    %v967 = vadd.f32 %v792, %v966
    %v968 = vpop.f32.mrb[0].mxu0
    %969 = vmatprep.mubr.bf16.mxu0 0
    %970 = vmatmul.mubr.bf16.gmra.mrb[0].mxu0 %v909
    %v971 = vpop.f32.mrb[0].mxu0
    %v972 = vadd.f32 %v797, %v971
    %v973 = vpop.f32.mrb[0].mxu0
    %v974 = vpop.f32.mrb[0].mxu0
    %v975 = vadd.f32 %v802, %v974
    %v976 = vpop.f32.mrb[0].mxu0
    %977 = vmatprep.mubr.bf16.mxu0 0
    %978 = vmatmul.mubr.bf16.gmra.mrb[0].mxu0 %v912
    %v979 = vpop.f32.mrb[0].mxu0
    %v980 = vadd.f32 %v807, %v979
    %v981 = vpop.f32.mrb[0].mxu0
    %v982 = vpop.f32.mrb[0].mxu0
    %v983 = vadd.f32 %v812, %v982
    %v984 = vpop.f32.mrb[0].mxu0
    %985 = vmatprep.mubr.bf16.mxu0 0
    %986 = vmatmul.mubr.bf16.gmra.mrb[0].mxu0 %v915
    %v987 = vpop.f32.mrb[0].mxu0
    %v988 = vadd.f32 %v817, %v987
    %v989 = vpop.f32.mrb[0].mxu0
    %v990 = vpop.f32.mrb[0].mxu0
    %v991 = vadd.f32 %v822, %v990
    %v992 = vpop.f32.mrb[0].mxu0
    %993 = vmatprep.mubr.bf16.mxu0 0
    %994 = vmatmul.mubr.bf16.gmra.mrb[0].mxu0 %v918
    %v995 = vpop.f32.mrb[0].mxu0
    %v996 = vadd.f32 %v827, %v995
    %v997 = vpop.f32.mrb[0].mxu0
    %v998 = vpop.f32.mrb[0].mxu0
    %v999 = vadd.f32 %v832, %v998
    %v1000 = vpop.f32.mrb[0].mxu0
    %1001 = vmatprep.mubr.bf16.mxu0 0
    %1002 = vmatmul.mubr.bf16.gmra.mrb[0].mxu0 %v921
    %v1003 = vpop.f32.mrb[0].mxu0
    %v1004 = vadd.f32 %v837, %v1003
    %v1005 = vpop.f32.mrb[0].mxu0
    %v1006 = vpop.f32.mrb[0].mxu0
    %v1007 = vadd.f32 %v842, %v1006
    %v1008 = vpop.f32.mrb[0].mxu0
    %1009 = vmatprep.mubr.bf16.mxu0 0
    %1010 = vmatmul.mubr.bf16.gmra.mrb[0].mxu0 %v924
    %v1011 = vpop.f32.mrb[0].mxu0
    %v1012 = vadd.f32 %v847, %v1011
    %v1013 = vpop.f32.mrb[0].mxu0
    %v1014 = vpop.f32.mrb[0].mxu0
    %v1015 = vadd.f32 %v852, %v1014
    %v1016 = vpop.f32.mrb[0].mxu0
    %1017 = vmatprep.mubr.bf16.mxu0 0
    %1018 = vmatmul.mubr.bf16.gmra.mrb[0].mxu0 %v927
    %v1019 = vpop.f32.mrb[0].mxu0
    %v1020 = vadd.f32 %v857, %v1019
    %v1021 = vpop.f32.mrb[0].mxu0
    %v1022 = vpop.f32.mrb[0].mxu0
    %v1023 = vadd.f32 %v862, %v1022
    %v1024 = vpop.f32.mrb[0].mxu0
    %1025 = vdwg.mxu0
    %v1026 = vmax.f32 %v964, 0.0
    %v1027 = vmax.f32 %v967, 0.0
    %v1028 = vmax.f32 %v972, 0.0
    %v1029 = vmax.f32 %v975, 0.0
    %v1030 = vmax.f32 %v980, 0.0
    %v1031 = vmax.f32 %v983, 0.0
    %v1032 = vmax.f32 %v988, 0.0
    %v1033 = vmax.f32 %v991, 0.0
    %v1034 = vmax.f32 %v996, 0.0
    %v1035 = vmax.f32 %v999, 0.0
    %v1036 = vmax.f32 %v1004, 0.0
    %v1037 = vmax.f32 %v1007, 0.0
    %v1038 = vmax.f32 %v1012, 0.0
    %v1039 = vmax.f32 %v1015, 0.0
    %v1040 = vmax.f32 %v1020, 0.0
    %v1041 = vmax.f32 %v1023, 0.0
    %v1042 = vld [vmem:[%s5] sm:$0xf]
    %v1043 = vld [vmem:[%s5 + $0x4] sm:$0xf]
    %v1044 = vld [vmem:[%s5 + $0x8] sm:$0xf]
    %v1045 = vld [vmem:[%s5 + $0xc] sm:$0xf]
    %v1046 = vld [vmem:[%s5 + $0x10] sm:$0xf]
    %v1047 = vld [vmem:[%s5 + $0x14] sm:$0xf]
    %v1048 = vld [vmem:[%s5 + $0x18] sm:$0xf]
    %v1049 = vld [vmem:[%s5 + $0x1c] sm:$0xf]
    %v1050 = vld [vmem:[%s5 + $0x20] sm:$0xf]
    %v1051 = vld [vmem:[%s5 + $0x24] sm:$0xf]
    %v1052 = vld [vmem:[%s5 + $0x28] sm:$0xf]
    %v1053 = vld [vmem:[%s5 + $0x2c] sm:$0xf]
    %v1054 = vld [vmem:[%s5 + $0x30] sm:$0xf]
    %v1055 = vld [vmem:[%s5 + $0x34] sm:$0xf]
    %v1056 = vld [vmem:[%s5 + $0x38] sm:$0xf]
    %v1057 = vld [vmem:[%s5 + $0x3c] sm:$0xf]
    %v1058 = vpack.c.bf16 %v1027, %v1026
    %v1059 = vpack.c.bf16 %v1029, %v1028
    %v1060 = vpack.c.bf16 %v1031, %v1030
    %v1061 = vpack.c.bf16 %v1033, %v1032
    %v1062 = vpack.c.bf16 %v1035, %v1034
    %v1063 = vpack.c.bf16 %v1037, %v1036
    %v1064 = vpack.c.bf16 %v1039, %v1038
    %v1065 = vpack.c.bf16 %v1041, %v1040
    %v1066 = vld [vmem:[%s6] sm:$0xff]
    %v1067 = vld [vmem:[%s6 + $0x8] sm:$0xff]
    %v1068 = vld [vmem:[%s6 + $0x10] sm:$0xff]
    %v1069 = vld [vmem:[%s6 + $0x18] sm:$0xff]
    %v1070 = vld [vmem:[%s6 + $0x20] sm:$0xff]
    %v1071 = vld [vmem:[%s6 + $0x28] sm:$0xff]
    %v1072 = vld [vmem:[%s6 + $0x30] sm:$0xff]
    %v1073 = vld [vmem:[%s6 + $0x38] sm:$0xff]
    %v1074 = vld [vmem:[%s6 + $0x40] sm:$0xff]
    %v1075 = vld [vmem:[%s6 + $0x48] sm:$0xff]
    %v1076 = vld [vmem:[%s6 + $0x50] sm:$0xff]
    %v1077 = vld [vmem:[%s6 + $0x58] sm:$0xff]
    %v1078 = vld [vmem:[%s6 + $0x60] sm:$0xff]
    %v1079 = vld [vmem:[%s6 + $0x68] sm:$0xff]
    %v1080 = vld [vmem:[%s6 + $0x70] sm:$0xff]
    %v1081 = vld [vmem:[%s6 + $0x78] sm:$0xff]
    %1083 = vset.pattern.permute.xlu0 0
    %1084 = vperm.xlu0 %1083, %v1066
    %v1085 = vpop.permute.xlu0 %1084
    %1088 = vset.pattern.permute.xlu0 0
    %1089 = vperm.xlu0 %1088, %v1067
    %v1090 = vpop.permute.xlu0 %1089
    %1093 = vset.pattern.permute.xlu0 0
    %1094 = vperm.xlu0 %1093, %v1068
    %v1095 = vpop.permute.xlu0 %1094
    %1098 = vset.pattern.permute.xlu0 0
    %1099 = vperm.xlu0 %1098, %v1069
    %v1100 = vpop.permute.xlu0 %1099
    %1103 = vset.pattern.permute.xlu0 0
    %1104 = vperm.xlu0 %1103, %v1070
    %v1105 = vpop.permute.xlu0 %1104
    %1108 = vset.pattern.permute.xlu0 0
    %1109 = vperm.xlu0 %1108, %v1071
    %v1110 = vpop.permute.xlu0 %1109
    %1113 = vset.pattern.permute.xlu0 0
    %1114 = vperm.xlu0 %1113, %v1072
    %v1115 = vpop.permute.xlu0 %1114
    %1118 = vset.pattern.permute.xlu0 0
    %1119 = vperm.xlu0 %1118, %v1073
    %v1120 = vpop.permute.xlu0 %1119
    %1123 = vset.pattern.permute.xlu0 0
    %1124 = vperm.xlu0 %1123, %v1074
    %v1125 = vpop.permute.xlu0 %1124
    %1128 = vset.pattern.permute.xlu0 0
    %1129 = vperm.xlu0 %1128, %v1075
    %v1130 = vpop.permute.xlu0 %1129
    %1133 = vset.pattern.permute.xlu0 0
    %1134 = vperm.xlu0 %1133, %v1076
    %v1135 = vpop.permute.xlu0 %1134
    %1138 = vset.pattern.permute.xlu0 0
    %1139 = vperm.xlu0 %1138, %v1077
    %v1140 = vpop.permute.xlu0 %1139
    %1143 = vset.pattern.permute.xlu0 0
    %1144 = vperm.xlu0 %1143, %v1078
    %v1145 = vpop.permute.xlu0 %1144
    %1148 = vset.pattern.permute.xlu0 0
    %1149 = vperm.xlu0 %1148, %v1079
    %v1150 = vpop.permute.xlu0 %1149
    %1153 = vset.pattern.permute.xlu0 0
    %1154 = vperm.xlu0 %1153, %v1080
    %v1155 = vpop.permute.xlu0 %1154
    %1158 = vset.pattern.permute.xlu0 0
    %1159 = vperm.xlu0 %1158, %v1081
    %v1160 = vpop.permute.xlu0 %1159
    %v1178 = vunpack.c.l.b16 %v1042
    %v1179 = vunpack.c.l.b16 %v1043
    %v1180 = vunpack.c.l.b16 %v1044
    %v1181 = vunpack.c.l.b16 %v1045
    %v1182 = vunpack.c.l.b16 %v1046
    %v1183 = vunpack.c.l.b16 %v1047
    %v1184 = vunpack.c.l.b16 %v1048
    %v1185 = vunpack.c.l.b16 %v1049
    %v1186 = vunpack.c.l.b16 %v1050
    %v1187 = vunpack.c.l.b16 %v1051
    %v1188 = vunpack.c.l.b16 %v1052
    %v1189 = vunpack.c.l.b16 %v1053
    %v1190 = vunpack.c.l.b16 %v1054
    %v1191 = vunpack.c.l.b16 %v1055
    %v1192 = vunpack.c.l.b16 %v1056
    %v1193 = vunpack.c.l.b16 %v1057
    %v1194 = vpack.c.b16 %v1179, %v1178
    %v1195 = vpack.c.b16 %v1181, %v1180
    %v1196 = vpack.c.b16 %v1183, %v1182
    %v1197 = vpack.c.b16 %v1185, %v1184
    %v1198 = vpack.c.b16 %v1187, %v1186
    %v1199 = vpack.c.b16 %v1189, %v1188
    %v1200 = vpack.c.b16 %v1191, %v1190
    %v1201 = vpack.c.b16 %v1193, %v1192
    %1210 = vmatprep.subr.bf16.mxu0 0
    %1211 = vmatpush1.bf16.msra.mxu0 %v1058
    %1212 = vmatprep.subr.bf16.mxu0 0
    %1213 = vmatpush1.bf16.msra.mxu0 %v1059
    %1214 = vmatprep.subr.bf16.mxu0 0
    %1215 = vmatpush1.bf16.msra.mxu0 %v1060
    %1216 = vmatprep.subr.bf16.mxu0 0
    %1217 = vmatpush1.bf16.msra.mxu0 %v1061
    %1218 = vmatprep.subr.bf16.mxu0 0
    %1219 = vmatpush1.bf16.msra.mxu0 %v1062
    %1220 = vmatprep.subr.bf16.mxu0 0
    %1221 = vmatpush1.bf16.msra.mxu0 %v1063
    %1222 = vmatprep.subr.bf16.mxu0 0
    %1223 = vmatpush1.bf16.msra.mxu0 %v1064
    %1224 = vmatprep.subr.bf16.mxu0 0
    %1225 = vmatpush1.bf16.msra.mxu0 %v1065
    %1226 = vmatprep.subr.bf16.mxu0 0
    %1227 = vmatpush1.bf16.msra.mxu0 0
    %1228 = vmatprep.subr.bf16.mxu0 0
    %1229 = vmatpush1.bf16.msra.mxu0 0
    %1230 = vmatprep.subr.bf16.mxu0 0
    %1231 = vmatpush1.bf16.msra.mxu0 0
    %1232 = vmatprep.subr.bf16.mxu0 0
    %1233 = vmatpush1.bf16.msra.mxu0 0
    %1234 = vmatprep.subr.bf16.mxu0 0
    %1235 = vmatpush1.bf16.msra.mxu0 0
    %1236 = vmatprep.subr.bf16.mxu0 0
    %1237 = vmatpush1.bf16.msra.mxu0 0
    %1238 = vmatprep.subr.bf16.mxu0 0
    %1239 = vmatpush1.bf16.msra.mxu0 0
    %1240 = vmatprep.subr.bf16.mxu0 0
    %1241 = vmatpush1.bf16.msra.mxu0 0
    %1242 = vmatprep.mubr.bf16.mxu0 0
    %1243 = vmatmul.mubr.bf16.gmra.mrb[0].mxu0 %v1194
    %v1244 = vpop.f32.mrb[0].mxu0
    %v1245 = vadd.f32 %v1085, %v1244
    %v1246 = vpop.f32.mrb[0].mxu0
    %v1247 = vpop.f32.mrb[0].mxu0
    %v1248 = vadd.f32 %v1090, %v1247
    %v1249 = vpop.f32.mrb[0].mxu0
    %1250 = vmatprep.mubr.bf16.mxu0 0
    %1251 = vmatmul.mubr.bf16.gmra.mrb[0].mxu0 %v1195
    %v1252 = vpop.f32.mrb[0].mxu0
    %v1253 = vadd.f32 %v1095, %v1252
    %v1254 = vpop.f32.mrb[0].mxu0
    %v1255 = vpop.f32.mrb[0].mxu0
    %v1256 = vadd.f32 %v1100, %v1255
    %v1257 = vpop.f32.mrb[0].mxu0
    %1258 = vmatprep.mubr.bf16.mxu0 0
    %1259 = vmatmul.mubr.bf16.gmra.mrb[0].mxu0 %v1196
    %v1260 = vpop.f32.mrb[0].mxu0
    %v1261 = vadd.f32 %v1105, %v1260
    %v1262 = vpop.f32.mrb[0].mxu0
    %v1263 = vpop.f32.mrb[0].mxu0
    %v1264 = vadd.f32 %v1110, %v1263
    %v1265 = vpop.f32.mrb[0].mxu0
    %1266 = vmatprep.mubr.bf16.mxu0 0
    %1267 = vmatmul.mubr.bf16.gmra.mrb[0].mxu0 %v1197
    %v1268 = vpop.f32.mrb[0].mxu0
    %v1269 = vadd.f32 %v1115, %v1268
    %v1270 = vpop.f32.mrb[0].mxu0
    %v1271 = vpop.f32.mrb[0].mxu0
    %v1272 = vadd.f32 %v1120, %v1271
    %v1273 = vpop.f32.mrb[0].mxu0
    %1274 = vmatprep.mubr.bf16.mxu0 0
    %1275 = vmatmul.mubr.bf16.gmra.mrb[0].mxu0 %v1198
    %v1276 = vpop.f32.mrb[0].mxu0
    %v1277 = vadd.f32 %v1125, %v1276
    %v1278 = vpop.f32.mrb[0].mxu0
    %v1279 = vpop.f32.mrb[0].mxu0
    %v1280 = vadd.f32 %v1130, %v1279
    %v1281 = vpop.f32.mrb[0].mxu0
    %1282 = vmatprep.mubr.bf16.mxu0 0
    %1283 = vmatmul.mubr.bf16.gmra.mrb[0].mxu0 %v1199
    %v1284 = vpop.f32.mrb[0].mxu0
    %v1285 = vadd.f32 %v1135, %v1284
    %v1286 = vpop.f32.mrb[0].mxu0
    %v1287 = vpop.f32.mrb[0].mxu0
    %v1288 = vadd.f32 %v1140, %v1287
    %v1289 = vpop.f32.mrb[0].mxu0
    %1290 = vmatprep.mubr.bf16.mxu0 0
    %1291 = vmatmul.mubr.bf16.gmra.mrb[0].mxu0 %v1200
    %v1292 = vpop.f32.mrb[0].mxu0
    %v1293 = vadd.f32 %v1145, %v1292
    %v1294 = vpop.f32.mrb[0].mxu0
    %v1295 = vpop.f32.mrb[0].mxu0
    %v1296 = vadd.f32 %v1150, %v1295
    %v1297 = vpop.f32.mrb[0].mxu0
    %1298 = vmatprep.mubr.bf16.mxu0 0
    %1299 = vmatmul.mubr.bf16.gmra.mrb[0].mxu0 %v1201
    %v1300 = vpop.f32.mrb[0].mxu0
    %v1301 = vadd.f32 %v1155, %v1300
    %v1302 = vpop.f32.mrb[0].mxu0
    %v1303 = vpop.f32.mrb[0].mxu0
    %v1304 = vadd.f32 %v1160, %v1303
    %v1305 = vpop.f32.mrb[0].mxu0
    %1306 = vdwg.mxu0
    %v1307 = vmax.f32 %v1245, 0.0
    %v1308 = vmax.f32 %v1248, 0.0
    %v1309 = vmax.f32 %v1253, 0.0
    %v1310 = vmax.f32 %v1256, 0.0
    %v1311 = vmax.f32 %v1261, 0.0
    %v1312 = vmax.f32 %v1264, 0.0
    %v1313 = vmax.f32 %v1269, 0.0
    %v1314 = vmax.f32 %v1272, 0.0
    %v1315 = vmax.f32 %v1277, 0.0
    %v1316 = vmax.f32 %v1280, 0.0
    %v1317 = vmax.f32 %v1285, 0.0
    %v1318 = vmax.f32 %v1288, 0.0
    %v1319 = vmax.f32 %v1293, 0.0
    %v1320 = vmax.f32 %v1296, 0.0
    %v1321 = vmax.f32 %v1301, 0.0
    %v1322 = vmax.f32 %v1304, 0.0
    %v1323 = vld [vmem:[%s7] sm:$0xf]
    %v1324 = vld [vmem:[%s7 + $0x4] sm:$0xf]
    %v1325 = vld [vmem:[%s7 + $0x8] sm:$0xf]
    %v1326 = vld [vmem:[%s7 + $0xc] sm:$0xf]
    %v1327 = vld [vmem:[%s7 + $0x10] sm:$0xf]
    %v1328 = vld [vmem:[%s7 + $0x14] sm:$0xf]
    %v1329 = vld [vmem:[%s7 + $0x18] sm:$0xf]
    %v1330 = vld [vmem:[%s7 + $0x1c] sm:$0xf]
    %v1331 = vld [vmem:[%s7 + $0x20] sm:$0xf]
    %v1332 = vld [vmem:[%s7 + $0x24] sm:$0xf]
    %v1333 = vld [vmem:[%s7 + $0x28] sm:$0xf]
    %v1334 = vld [vmem:[%s7 + $0x2c] sm:$0xf]
    %v1335 = vld [vmem:[%s7 + $0x30] sm:$0xf]
    %v1336 = vld [vmem:[%s7 + $0x34] sm:$0xf]
    %v1337 = vld [vmem:[%s7 + $0x38] sm:$0xf]
    %v1338 = vld [vmem:[%s7 + $0x3c] sm:$0xf]
    %v1339 = vpack.c.bf16 %v1308, %v1307
    %v1340 = vpack.c.bf16 %v1310, %v1309
    %v1341 = vpack.c.bf16 %v1312, %v1311
    %v1342 = vpack.c.bf16 %v1314, %v1313
    %v1343 = vpack.c.bf16 %v1316, %v1315
    %v1344 = vpack.c.bf16 %v1318, %v1317
    %v1345 = vpack.c.bf16 %v1320, %v1319
    %v1346 = vpack.c.bf16 %v1322, %v1321
    %v1347 = vld [vmem:[%s8] sm:$0xff]
    %v1348 = vld [vmem:[%s8 + $0x8] sm:$0xff]
    %v1349 = vld [vmem:[%s8 + $0x10] sm:$0xff]
    %v1350 = vld [vmem:[%s8 + $0x18] sm:$0xff]
    %v1351 = vld [vmem:[%s8 + $0x20] sm:$0xff]
    %v1352 = vld [vmem:[%s8 + $0x28] sm:$0xff]
    %v1353 = vld [vmem:[%s8 + $0x30] sm:$0xff]
    %v1354 = vld [vmem:[%s8 + $0x38] sm:$0xff]
    %v1355 = vld [vmem:[%s8 + $0x40] sm:$0xff]
    %v1356 = vld [vmem:[%s8 + $0x48] sm:$0xff]
    %v1357 = vld [vmem:[%s8 + $0x50] sm:$0xff]
    %v1358 = vld [vmem:[%s8 + $0x58] sm:$0xff]
    %v1359 = vld [vmem:[%s8 + $0x60] sm:$0xff]
    %v1360 = vld [vmem:[%s8 + $0x68] sm:$0xff]
    %v1361 = vld [vmem:[%s8 + $0x70] sm:$0xff]
    %v1362 = vld [vmem:[%s8 + $0x78] sm:$0xff]
    %1364 = vset.pattern.permute.xlu0 0
    %1365 = vperm.xlu0 %1364, %v1347
    %v1366 = vpop.permute.xlu0 %1365
    %1369 = vset.pattern.permute.xlu0 0
    %1370 = vperm.xlu0 %1369, %v1348
    %v1371 = vpop.permute.xlu0 %1370
    %1374 = vset.pattern.permute.xlu0 0
    %1375 = vperm.xlu0 %1374, %v1349
    %v1376 = vpop.permute.xlu0 %1375
    %1379 = vset.pattern.permute.xlu0 0
    %1380 = vperm.xlu0 %1379, %v1350
    %v1381 = vpop.permute.xlu0 %1380
    %1384 = vset.pattern.permute.xlu0 0
    %1385 = vperm.xlu0 %1384, %v1351
    %v1386 = vpop.permute.xlu0 %1385
    %1389 = vset.pattern.permute.xlu0 0
    %1390 = vperm.xlu0 %1389, %v1352
    %v1391 = vpop.permute.xlu0 %1390
    %1394 = vset.pattern.permute.xlu0 0
    %1395 = vperm.xlu0 %1394, %v1353
    %v1396 = vpop.permute.xlu0 %1395
    %1399 = vset.pattern.permute.xlu0 0
    %1400 = vperm.xlu0 %1399, %v1354
    %v1401 = vpop.permute.xlu0 %1400
    %1404 = vset.pattern.permute.xlu0 0
    %1405 = vperm.xlu0 %1404, %v1355
    %v1406 = vpop.permute.xlu0 %1405
    %1409 = vset.pattern.permute.xlu0 0
    %1410 = vperm.xlu0 %1409, %v1356
    %v1411 = vpop.permute.xlu0 %1410
    %1414 = vset.pattern.permute.xlu0 0
    %1415 = vperm.xlu0 %1414, %v1357
    %v1416 = vpop.permute.xlu0 %1415
    %1419 = vset.pattern.permute.xlu0 0
    %1420 = vperm.xlu0 %1419, %v1358
    %v1421 = vpop.permute.xlu0 %1420
    %1424 = vset.pattern.permute.xlu0 0
    %1425 = vperm.xlu0 %1424, %v1359
    %v1426 = vpop.permute.xlu0 %1425
    %1429 = vset.pattern.permute.xlu0 0
    %1430 = vperm.xlu0 %1429, %v1360
    %v1431 = vpop.permute.xlu0 %1430
    %1434 = vset.pattern.permute.xlu0 0
    %1435 = vperm.xlu0 %1434, %v1361
    %v1436 = vpop.permute.xlu0 %1435
    %1439 = vset.pattern.permute.xlu0 0
    %1440 = vperm.xlu0 %1439, %v1362
    %v1441 = vpop.permute.xlu0 %1440
    %v1459 = vunpack.c.l.b16 %v1323
    %v1460 = vunpack.c.l.b16 %v1324
    %v1461 = vunpack.c.l.b16 %v1325
    %v1462 = vunpack.c.l.b16 %v1326
    %v1463 = vunpack.c.l.b16 %v1327
    %v1464 = vunpack.c.l.b16 %v1328
    %v1465 = vunpack.c.l.b16 %v1329
    %v1466 = vunpack.c.l.b16 %v1330
    %v1467 = vunpack.c.l.b16 %v1331
    %v1468 = vunpack.c.l.b16 %v1332
    %v1469 = vunpack.c.l.b16 %v1333
    %v1470 = vunpack.c.l.b16 %v1334
    %v1471 = vunpack.c.l.b16 %v1335
    %v1472 = vunpack.c.l.b16 %v1336
    %v1473 = vunpack.c.l.b16 %v1337
    %v1474 = vunpack.c.l.b16 %v1338
    %v1475 = vpack.c.b16 %v1460, %v1459
    %v1476 = vpack.c.b16 %v1462, %v1461
    %v1477 = vpack.c.b16 %v1464, %v1463
    %v1478 = vpack.c.b16 %v1466, %v1465
    %v1479 = vpack.c.b16 %v1468, %v1467
    %v1480 = vpack.c.b16 %v1470, %v1469
    %v1481 = vpack.c.b16 %v1472, %v1471
    %v1482 = vpack.c.b16 %v1474, %v1473
    %1491 = vmatprep.subr.bf16.mxu0 0
    %1492 = vmatpush1.bf16.msra.mxu0 %v1339
    %1493 = vmatprep.subr.bf16.mxu0 0
    %1494 = vmatpush1.bf16.msra.mxu0 %v1340
    %1495 = vmatprep.subr.bf16.mxu0 0
    %1496 = vmatpush1.bf16.msra.mxu0 %v1341
    %1497 = vmatprep.subr.bf16.mxu0 0
    %1498 = vmatpush1.bf16.msra.mxu0 %v1342
    %1499 = vmatprep.subr.bf16.mxu0 0
    %1500 = vmatpush1.bf16.msra.mxu0 %v1343
    %1501 = vmatprep.subr.bf16.mxu0 0
    %1502 = vmatpush1.bf16.msra.mxu0 %v1344
    %1503 = vmatprep.subr.bf16.mxu0 0
    %1504 = vmatpush1.bf16.msra.mxu0 %v1345
    %1505 = vmatprep.subr.bf16.mxu0 0
    %1506 = vmatpush1.bf16.msra.mxu0 %v1346
    %1507 = vmatprep.subr.bf16.mxu0 0
    %1508 = vmatpush1.bf16.msra.mxu0 0
    %1509 = vmatprep.subr.bf16.mxu0 0
    %1510 = vmatpush1.bf16.msra.mxu0 0
    %1511 = vmatprep.subr.bf16.mxu0 0
    %1512 = vmatpush1.bf16.msra.mxu0 0
    %1513 = vmatprep.subr.bf16.mxu0 0
    %1514 = vmatpush1.bf16.msra.mxu0 0
    %1515 = vmatprep.subr.bf16.mxu0 0
    %1516 = vmatpush1.bf16.msra.mxu0 0
    %1517 = vmatprep.subr.bf16.mxu0 0
    %1518 = vmatpush1.bf16.msra.mxu0 0
    %1519 = vmatprep.subr.bf16.mxu0 0
    %1520 = vmatpush1.bf16.msra.mxu0 0
    %1521 = vmatprep.subr.bf16.mxu0 0
    %1522 = vmatpush1.bf16.msra.mxu0 0
    %1523 = vmatprep.mubr.bf16.mxu0 0
    %1524 = vmatmul.mubr.bf16.gmra.mrb[0].mxu0 %v1475
    %v1525 = vpop.f32.mrb[0].mxu0
    %v1526 = vadd.f32 %v1366, %v1525
    %v1527 = vpop.f32.mrb[0].mxu0
    %v1528 = vpop.f32.mrb[0].mxu0
    %v1529 = vadd.f32 %v1371, %v1528
    %v1530 = vpop.f32.mrb[0].mxu0
    %1531 = vmatprep.mubr.bf16.mxu0 0
    %1532 = vmatmul.mubr.bf16.gmra.mrb[0].mxu0 %v1476
    %v1533 = vpop.f32.mrb[0].mxu0
    %v1534 = vadd.f32 %v1376, %v1533
    %v1535 = vpop.f32.mrb[0].mxu0
    %v1536 = vpop.f32.mrb[0].mxu0
    %v1537 = vadd.f32 %v1381, %v1536
    %v1538 = vpop.f32.mrb[0].mxu0
    %1539 = vmatprep.mubr.bf16.mxu0 0
    %1540 = vmatmul.mubr.bf16.gmra.mrb[0].mxu0 %v1477
    %v1541 = vpop.f32.mrb[0].mxu0
    %v1542 = vadd.f32 %v1386, %v1541
    %v1543 = vpop.f32.mrb[0].mxu0
    %v1544 = vpop.f32.mrb[0].mxu0
    %v1545 = vadd.f32 %v1391, %v1544
    %v1546 = vpop.f32.mrb[0].mxu0
    %1547 = vmatprep.mubr.bf16.mxu0 0
    %1548 = vmatmul.mubr.bf16.gmra.mrb[0].mxu0 %v1478
    %v1549 = vpop.f32.mrb[0].mxu0
    %v1550 = vadd.f32 %v1396, %v1549
    %v1551 = vpop.f32.mrb[0].mxu0
    %v1552 = vpop.f32.mrb[0].mxu0
    %v1553 = vadd.f32 %v1401, %v1552
    %v1554 = vpop.f32.mrb[0].mxu0
    %1555 = vmatprep.mubr.bf16.mxu0 0
    %1556 = vmatmul.mubr.bf16.gmra.mrb[0].mxu0 %v1479
    %v1557 = vpop.f32.mrb[0].mxu0
    %v1558 = vadd.f32 %v1406, %v1557
    %v1559 = vpop.f32.mrb[0].mxu0
    %v1560 = vpop.f32.mrb[0].mxu0
    %v1561 = vadd.f32 %v1411, %v1560
    %v1562 = vpop.f32.mrb[0].mxu0
    %1563 = vmatprep.mubr.bf16.mxu0 0
    %1564 = vmatmul.mubr.bf16.gmra.mrb[0].mxu0 %v1480
    %v1565 = vpop.f32.mrb[0].mxu0
    %v1566 = vadd.f32 %v1416, %v1565
    %v1567 = vpop.f32.mrb[0].mxu0
    %v1568 = vpop.f32.mrb[0].mxu0
    %v1569 = vadd.f32 %v1421, %v1568
    %v1570 = vpop.f32.mrb[0].mxu0
    %1571 = vmatprep.mubr.bf16.mxu0 0
    %1572 = vmatmul.mubr.bf16.gmra.mrb[0].mxu0 %v1481
    %v1573 = vpop.f32.mrb[0].mxu0
    %v1574 = vadd.f32 %v1426, %v1573
    %v1575 = vpop.f32.mrb[0].mxu0
    %v1576 = vpop.f32.mrb[0].mxu0
    %v1577 = vadd.f32 %v1431, %v1576
    %v1578 = vpop.f32.mrb[0].mxu0
    %1579 = vmatprep.mubr.bf16.mxu0 0
    %1580 = vmatmul.mubr.bf16.gmra.mrb[0].mxu0 %v1482
    %v1581 = vpop.f32.mrb[0].mxu0
    %v1582 = vadd.f32 %v1436, %v1581
    %v1583 = vpop.f32.mrb[0].mxu0
    %v1584 = vpop.f32.mrb[0].mxu0
    %v1585 = vadd.f32 %v1441, %v1584
    %v1586 = vpop.f32.mrb[0].mxu0
    %1587 = vdwg.mxu0
    %v1588 = vmax.f32 %v1526, 0.0
    %v1589 = vmax.f32 %v1529, 0.0
    %v1590 = vmax.f32 %v1534, 0.0
    %v1591 = vmax.f32 %v1537, 0.0
    %v1592 = vmax.f32 %v1542, 0.0
    %v1593 = vmax.f32 %v1545, 0.0
    %v1594 = vmax.f32 %v1550, 0.0
    %v1595 = vmax.f32 %v1553, 0.0
    %v1596 = vmax.f32 %v1558, 0.0
    %v1597 = vmax.f32 %v1561, 0.0
    %v1598 = vmax.f32 %v1566, 0.0
    %v1599 = vmax.f32 %v1569, 0.0
    %v1600 = vmax.f32 %v1574, 0.0
    %v1601 = vmax.f32 %v1577, 0.0
    %v1602 = vmax.f32 %v1582, 0.0
    %v1603 = vmax.f32 %v1585, 0.0
    %v1604 = vld [vmem:[%s9] sm:$0xff]
    %v1605 = vld [vmem:[%s9 + $0x8] sm:$0xff]
    %v1606 = vld [vmem:[%s9 + $0x10] sm:$0xff]
    %v1607 = vld [vmem:[%s9 + $0x18] sm:$0xff]
    %v1608 = vld [vmem:[%s9 + $0x20] sm:$0xff]
    %v1609 = vld [vmem:[%s9 + $0x28] sm:$0xff]
    %v1610 = vld [vmem:[%s9 + $0x30] sm:$0xff]
    %v1611 = vld [vmem:[%s9 + $0x38] sm:$0xff]
    %v1612 = vld [vmem:[%s9 + $0x40] sm:$0xff]
    %v1613 = vld [vmem:[%s9 + $0x48] sm:$0xff]
    %v1614 = vld [vmem:[%s9 + $0x50] sm:$0xff]
    %v1615 = vld [vmem:[%s9 + $0x58] sm:$0xff]
    %v1616 = vld [vmem:[%s9 + $0x60] sm:$0xff]
    %v1617 = vld [vmem:[%s9 + $0x68] sm:$0xff]
    %v1618 = vld [vmem:[%s9 + $0x70] sm:$0xff]
    %v1619 = vld [vmem:[%s9 + $0x78] sm:$0xff]
    %1621 = vset.pattern.permute.xlu0 0
    %1622 = vperm.xlu0 %1621, %v1604
    %v1623 = vpop.permute.xlu0 %1622
    %1626 = vset.pattern.permute.xlu0 0
    %1627 = vperm.xlu0 %1626, %v1605
    %v1628 = vpop.permute.xlu0 %1627
    %1631 = vset.pattern.permute.xlu0 0
    %1632 = vperm.xlu0 %1631, %v1606
    %v1633 = vpop.permute.xlu0 %1632
    %1636 = vset.pattern.permute.xlu0 0
    %1637 = vperm.xlu0 %1636, %v1607
    %v1638 = vpop.permute.xlu0 %1637
    %1641 = vset.pattern.permute.xlu0 0
    %1642 = vperm.xlu0 %1641, %v1608
    %v1643 = vpop.permute.xlu0 %1642
    %1646 = vset.pattern.permute.xlu0 0
    %1647 = vperm.xlu0 %1646, %v1609
    %v1648 = vpop.permute.xlu0 %1647
    %1651 = vset.pattern.permute.xlu0 0
    %1652 = vperm.xlu0 %1651, %v1610
    %v1653 = vpop.permute.xlu0 %1652
    %1656 = vset.pattern.permute.xlu0 0
    %1657 = vperm.xlu0 %1656, %v1611
    %v1658 = vpop.permute.xlu0 %1657
    %1661 = vset.pattern.permute.xlu0 0
    %1662 = vperm.xlu0 %1661, %v1612
    %v1663 = vpop.permute.xlu0 %1662
    %1666 = vset.pattern.permute.xlu0 0
    %1667 = vperm.xlu0 %1666, %v1613
    %v1668 = vpop.permute.xlu0 %1667
    %1671 = vset.pattern.permute.xlu0 0
    %1672 = vperm.xlu0 %1671, %v1614
    %v1673 = vpop.permute.xlu0 %1672
    %1676 = vset.pattern.permute.xlu0 0
    %1677 = vperm.xlu0 %1676, %v1615
    %v1678 = vpop.permute.xlu0 %1677
    %1681 = vset.pattern.permute.xlu0 0
    %1682 = vperm.xlu0 %1681, %v1616
    %v1683 = vpop.permute.xlu0 %1682
    %1686 = vset.pattern.permute.xlu0 0
    %1687 = vperm.xlu0 %1686, %v1617
    %v1688 = vpop.permute.xlu0 %1687
    %1691 = vset.pattern.permute.xlu0 0
    %1692 = vperm.xlu0 %1691, %v1618
    %v1693 = vpop.permute.xlu0 %1692
    %1696 = vset.pattern.permute.xlu0 0
    %1697 = vperm.xlu0 %1696, %v1619
    %v1698 = vpop.permute.xlu0 %1697
    %v1700 = vmul.f32 %v1588, %v1623
    %v1701 = vmul.f32 %v1589, %v1628
    %v1702 = vmul.f32 %v1590, %v1633
    %v1703 = vmul.f32 %v1591, %v1638
    %v1704 = vmul.f32 %v1592, %v1643
    %v1705 = vmul.f32 %v1593, %v1648
    %v1706 = vmul.f32 %v1594, %v1653
    %v1707 = vmul.f32 %v1595, %v1658
    %v1708 = vmul.f32 %v1596, %v1663
    %v1709 = vmul.f32 %v1597, %v1668
    %v1710 = vmul.f32 %v1598, %v1673
    %v1711 = vmul.f32 %v1599, %v1678
    %v1712 = vmul.f32 %v1600, %v1683
    %v1713 = vmul.f32 %v1601, %v1688
    %v1714 = vmul.f32 %v1602, %v1693
    %v1715 = vmul.f32 %v1603, %v1698
    %v1716 = vadd.f32 %v1700, %v1701
    %v1717 = vadd.f32 %v1716, %v1702
    %v1718 = vadd.f32 %v1717, %v1703
    %v1719 = vadd.f32 %v1718, %v1704
    %v1720 = vadd.f32 %v1719, %v1705
    %v1721 = vadd.f32 %v1720, %v1706
    %v1722 = vadd.f32 %v1721, %v1707
    %v1723 = vadd.f32 %v1722, %v1708
    %v1724 = vadd.f32 %v1723, %v1709
    %v1725 = vadd.f32 %v1724, %v1710
    %v1726 = vadd.f32 %v1725, %v1711
    %v1727 = vadd.f32 %v1726, %v1712
    %v1728 = vadd.f32 %v1727, %v1713
    %v1729 = vadd.f32 %v1728, %v1714
    %v1730 = vadd.f32 %v1729, %v1715
    %v1731 = vrot.slane %v1730, 4
    %v1732 = vadd.f32 %v1730, %v1731
    %v1733 = vrot.slane %v1732, 2
    %v1734 = vadd.f32 %v1732, %v1733
    %v1735 = vrot.slane %v1734, 1
    %v1736 = vadd.f32 %v1734, %v1735
    %v1737 = vld [vmem:[#allocation2] sm:$0x1]
    %1739 = vset.pattern.permute.xlu0 0
    %1740 = vperm.xlu0 %1739, %v1737
    %v1741 = vpop.permute.xlu0 %1740
    %v1743 = vlaneseq
    %v1744 = vshrl.u32 %v1743, 7
    %v1745 = vsub.s32 0, %v1744
    %v1746 = vrot.slane %v1741, %v1745
    %v1747 = vadd.f32 %v1736, %v1746
    %1748 = vst [vmem:[#allocation3] sm:$0x1] %v1747
    // Predicated region
    $region46: #{tpu_custom_call.1} parent=1 // pred_check
      _
    $region47: #{tpu_custom_call.1} parent=1 // pred_check_branch
      %1750 = sbr.rel (0) target = $region49
    $region48: #{tpu_custom_call.1} parent=1 // pred_region
      %s1752 = ssub.s32 16, 16
      %1753 = vsyncadd [#allocation4], %s1752
      %s1755 = sshll.u32 [#allocation3], 4
      %s1756 = int_to_ptr.vmem [resolvable:$true] %s1755
      %1758 = dma.vmem_to_hbm [thread:$0]  %s1756, 16, %s11, [#allocation4]
    $region49: #{tpu_custom_call.1} parent=1 // pred_fallthru
      _
    // Predicated region
    $region50: #{tpu_custom_call.1} parent=1 // pred_check
      _
    $region51: #{tpu_custom_call.1} parent=1 // pred_check_branch
      %1760 = sbr.rel (0) target = $region53
    $region52: #{tpu_custom_call.1} parent=1 // pred_region
      %1761 = dma.done [#allocation4], 16
    $region53: #{tpu_custom_call.1} parent=1 // pred_fallthru
      _
    %1762 = vsyncpa [#allocation4], 1

</llo_original>
